<compile_context>
chip_gen: v7x
topology: tpu7x:2x2x1
jax: 0.10.0
libtpu: 0.0.40
codegen_flags: <defaults>
</compile_context>

<pallas_src>
import functools

import jax
import jax.numpy as jnp
from jax.experimental import pallas as pl
from jax.experimental.pallas import tpu as pltpu


def _autoencoder_kernel(x_ref, w1_ref, b1_ref, w2_ref, b2_ref, o_ref):
    # In-kernel cast: f32 activations -> bf16 MXU operands (free on the VPU).
    x_bf = x_ref[...].astype(jnp.bfloat16)

    # Encoder: h = relu(x @ W1 + b1); f32 accumulation, f32 epilogue.
    h = jnp.dot(x_bf, w1_ref[...], preferred_element_type=jnp.float32)
    h = h + b1_ref[...]            # b1 is (1, D_hid) -> broadcasts over rows
    h = jnp.maximum(h, 0.0)        # ReLU in f32

    # Decoder: y = h @ W2 + b2 (re-cast h to bf16 for the MXU).
    y = jnp.dot(h.astype(jnp.bfloat16), w2_ref[...],
                preferred_element_type=jnp.float32)
    y = y + b2_ref[...]            # b2 is (1, D_in)
    o_ref[...] = y.astype(o_ref.dtype)


def prepare_params(w1, b1, w2, b2):
    """One-time parameter prep (outside the jitted forward).

    Weights -> bf16 (halves weight DMA, native MXU path), biases -> f32
    (epilogue precision).  Doing this once avoids per-call cast passes.
    """
    return (w1.astype(jnp.bfloat16), b1.astype(jnp.float32),
            w2.astype(jnp.bfloat16), b2.astype(jnp.float32))


@functools.partial(jax.jit, static_argnames=("tb",))
def autoencoder_forward(x, w1_bf, b1_f32, w2_bf, b2_f32, *, tb=512):
    """Fused autoencoder forward.

    x: [B, D_in] f32 (cast to bf16 inside the kernel).
    w1_bf/w2_bf: bf16 weights, b1_f32/b2_f32: f32 biases (from prepare_params).
    Output: [B, D_in] f32.
    """
    B, D_in = x.shape
    D_hid = w1_bf.shape[1]

    # Tile: multiple of 16 rows (bf16 sublane packing), capped at `tb`.
    # tb=512 -> grid=(2,) for B=1024: low step overhead, even tile count for
    # the two v7x TensorCores.
    tile = min(tb, B)
    tile = max(16, ((tile + 15) // 16) * 16)
    n_tiles = pl.cdiv(B, tile)
    B_pad = n_tiles * tile
    if B_pad != B:
        # Rare ragged-batch fallback (not hit when B % tile == 0).
        # TODO(synk): mask the last tile in-kernel instead of pad/slice.
        x = jnp.pad(x, ((0, B_pad - B), (0, 0)))

    cost = pl.CostEstimate(
        flops=4 * B_pad * D_in * D_hid,            # two matmuls: 2*B*Din*Dhid each
        transcendentals=0,
        bytes_accessed=(B_pad * D_in * 4            # x read (f32)
                        + w1_bf.size * 2 + w2_bf.size * 2
                        + b1_f32.size * 4 + b2_f32.size * 4
                        + B_pad * D_in * 4),        # output write (f32)
    )

    out = pl.pallas_call(
        _autoencoder_kernel,
        out_shape=jax.ShapeDtypeStruct((B_pad, D_in), jnp.float32),
        grid_spec=pltpu.PrefetchScalarGridSpec(
            num_scalar_prefetch=0,
            grid=(n_tiles,),
            in_specs=[
                # Batch-tiled activations (double-buffered by the pipeline).
                pl.BlockSpec((tile, D_in), lambda i: (i, 0)),     # x tile (f32)
                # Constant index_map -> weights/biases stay VMEM-resident and
                # are DMA'd once for the whole grid.
                pl.BlockSpec((D_in, D_hid), lambda i: (0, 0)),    # W1 (bf16)
                pl.BlockSpec((1, D_hid), lambda i: (0, 0)),       # b1 (f32)
                pl.BlockSpec((D_hid, D_in), lambda i: (0, 0)),    # W2 (bf16)
                pl.BlockSpec((1, D_in), lambda i: (0, 0)),        # b2 (f32)
            ],
            out_specs=pl.BlockSpec((tile, D_in), lambda i: (i, 0)),
        ),
        compiler_params=pltpu.CompilerParams(
            # Batch tiles are independent -> shard across TCs on v7x.
            dimension_semantics=("parallel",),
            # Explicit VMEM budget (insurance for v7x's 64 MiB VMEM); actual
            # use here is ~2.5 MB double-buffered.
            vmem_limit_bytes=32 * 1024 * 1024,
        ),
        cost_estimate=cost,
    )(x, w1_bf, b1_f32, w2_bf, b2_f32)

    if B_pad != B:
        out = out[:B]
    return out


def reference_forward(x, w1, b1, w2, b2):
    h = jnp.maximum(x @ w1 + b1, 0.0)
    return h @ w2 + b2


if __name__ == "__main__":
    # Deterministic parameter init (synthetic weights, no checkpoint load).
    key = jax.random.PRNGKey(0)
    k_x, k_w1, k_b1, k_w2, k_b2 = jax.random.split(key, 5)

    # One batch through a single pallas_call; tb=512 -> grid=(2,).
    B, D_in, D_hid = 1024, 256, 128

    x = jax.random.normal(k_x, (B, D_in), dtype=jnp.float32)
    # Kaiming-ish scaled init, stored as [in_features, out_features].
    w1 = jax.random.normal(k_w1, (D_in, D_hid), dtype=jnp.float32) * (1.0 / D_in) ** 0.5
    b1 = jax.random.normal(k_b1, (1, D_hid), dtype=jnp.float32) * 0.01
    w2 = jax.random.normal(k_w2, (D_hid, D_in), dtype=jnp.float32) * (1.0 / D_hid) ** 0.5
    b2 = jax.random.normal(k_b2, (1, D_in), dtype=jnp.float32) * 0.01

    # One-time param prep (outside the jitted forward / inference loop).
    w1_bf, b1_f32, w2_bf, b2_f32 = jax.block_until_ready(
        prepare_params(w1, b1, w2, b2))

    out = autoencoder_forward(x, w1_bf, b1_f32, w2_bf, b2_f32)
    jax.block_until_ready(out)

    ref = reference_forward(x, w1, b1, w2, b2)
    assert out.shape == (B, D_in)
    # bf16 matmul operands (f32 accumulation) -> ~1e-2 deviation vs f32 ref.
    assert jnp.allclose(out, ref, atol=5e-2, rtol=5e-2), "mismatch vs reference"

    print("KERNEL_OK")
</pallas_src>

<mosaic_0001>
module attributes {stable_mosaic.version = 11 : i64} {
  func.func @_autoencoder_kernel(%arg0: i32, %arg1: memref<512x256xf32, #tpu.memory_space<vmem>>, %arg2: memref<256x128xbf16, #tpu.memory_space<vmem>>, %arg3: memref<1x128xf32, #tpu.memory_space<vmem>>, %arg4: memref<128x256xbf16, #tpu.memory_space<vmem>>, %arg5: memref<1x256xf32, #tpu.memory_space<vmem>>, %arg6: memref<512x256xf32, #tpu.memory_space<vmem>>) attributes {dimension_semantics = [#tpu.dimension_semantics<parallel>], iteration_bounds = array<i64: 2>, scalar_prefetch = 0 : i64, scratch_operands = 0 : i64, tpu.core_type = #tpu.core_type<tc>, window_params = [{transform_indices = @transform_0, window_bounds = array<i64: 512, 256>}, {pipeline_mode = #tpu.pipeline_mode<synchronous>, transform_indices = @transform_1, window_bounds = array<i64: 256, 128>}, {pipeline_mode = #tpu.pipeline_mode<synchronous>, transform_indices = @transform_2, window_bounds = array<i64: 1, 128>}, {pipeline_mode = #tpu.pipeline_mode<synchronous>, transform_indices = @transform_3, window_bounds = array<i64: 128, 256>}, {pipeline_mode = #tpu.pipeline_mode<synchronous>, transform_indices = @transform_4, window_bounds = array<i64: 1, 256>}, {transform_indices = @transform_5, window_bounds = array<i64: 512, 256>}]} {
    %c0 = arith.constant 0 : index
    %c0_0 = arith.constant 0 : index
    %0 = vector.load %arg1[%c0, %c0_0] : memref<512x256xf32, #tpu.memory_space<vmem>>, vector<512x256xf32>
    %1 = arith.truncf %0 : vector<512x256xf32> to vector<512x256xbf16>
    %c0_1 = arith.constant 0 : index
    %c0_2 = arith.constant 0 : index
    %2 = vector.load %arg2[%c0_1, %c0_2] : memref<256x128xbf16, #tpu.memory_space<vmem>>, vector<256x128xbf16>
    %cst = arith.constant dense<0.000000e+00> : vector<512x128xf32>
    %3 = tpu.matmul %1, %2, %cst {dimension_numbers = #tpu.dot_dimension_numbers<[1], [0], [0], [1], [0, 0, 1, 1], [], []>} : vector<512x256xbf16>, vector<256x128xbf16>, vector<512x128xf32> -> vector<512x128xf32>
    %c0_3 = arith.constant 0 : index
    %c0_4 = arith.constant 0 : index
    %4 = vector.load %arg3[%c0_3, %c0_4] : memref<1x128xf32, #tpu.memory_space<vmem>>, vector<1x128xf32>
    %5 = vector.broadcast %4 : vector<1x128xf32> to vector<512x128xf32>
    %6 = arith.addf %3, %5 : vector<512x128xf32>
    %cst_5 = arith.constant 0.000000e+00 : f32
    %7 = vector.broadcast %cst_5 : f32 to vector<512x128xf32>
    %8 = arith.maximumf %6, %7 : vector<512x128xf32>
    %9 = arith.truncf %8 : vector<512x128xf32> to vector<512x128xbf16>
    %c0_6 = arith.constant 0 : index
    %c0_7 = arith.constant 0 : index
    %10 = vector.load %arg4[%c0_6, %c0_7] : memref<128x256xbf16, #tpu.memory_space<vmem>>, vector<128x256xbf16>
    %cst_8 = arith.constant dense<0.000000e+00> : vector<512x256xf32>
    %11 = tpu.matmul %9, %10, %cst_8 {dimension_numbers = #tpu.dot_dimension_numbers<[1], [0], [0], [1], [0, 0, 1, 1], [], []>} : vector<512x128xbf16>, vector<128x256xbf16>, vector<512x256xf32> -> vector<512x256xf32>
    %c0_9 = arith.constant 0 : index
    %c0_10 = arith.constant 0 : index
    %12 = vector.load %arg5[%c0_9, %c0_10] : memref<1x256xf32, #tpu.memory_space<vmem>>, vector<1x256xf32>
    %13 = vector.broadcast %12 : vector<1x256xf32> to vector<512x256xf32>
    %14 = arith.addf %11, %13 : vector<512x256xf32>
    %c0_11 = arith.constant 0 : index
    %c0_12 = arith.constant 0 : index
    %15 = vector.load %arg6[%c0_11, %c0_12] : memref<512x256xf32, #tpu.memory_space<vmem>>, vector<512x256xf32>
    tpu.vector_store %arg6[%c0_11, %c0_12], %14 {strides = array<i32>} : memref<512x256xf32, #tpu.memory_space<vmem>>, vector<512x256xf32>,
    return
  }
  func.func @transform_0(%arg0: i32) -> (i32, i32) {
    %c0_i32 = arith.constant 0 : i32
    %c0_i32_0 = arith.constant 0 : i32
    return %arg0, %c0_i32 : i32, i32
  }
  func.func @transform_1(%arg0: i32) -> (i32, i32) {
    %c0_i32 = arith.constant 0 : i32
    %c0_i32_0 = arith.constant 0 : i32
    %c0_i32_1 = arith.constant 0 : i32
    return %c0_i32, %c0_i32_0 : i32, i32
  }
  func.func @transform_2(%arg0: i32) -> (i32, i32) {
    %c0_i32 = arith.constant 0 : i32
    %c0_i32_0 = arith.constant 0 : i32
    %c0_i32_1 = arith.constant 0 : i32
    return %c0_i32, %c0_i32_0 : i32, i32
  }
  func.func @transform_3(%arg0: i32) -> (i32, i32) {
    %c0_i32 = arith.constant 0 : i32
    %c0_i32_0 = arith.constant 0 : i32
    %c0_i32_1 = arith.constant 0 : i32
    return %c0_i32, %c0_i32_0 : i32, i32
  }
  func.func @transform_4(%arg0: i32) -> (i32, i32) {
    %c0_i32 = arith.constant 0 : i32
    %c0_i32_0 = arith.constant 0 : i32
    %c0_i32_1 = arith.constant 0 : i32
    return %c0_i32, %c0_i32_0 : i32, i32
  }
  func.func @transform_5(%arg0: i32) -> (i32, i32) {
    %c0_i32 = arith.constant 0 : i32
    %c0_i32_0 = arith.constant 0 : i32
    return %arg0, %c0_i32 : i32, i32
  }
}

</mosaic_0001>

<llo_original>
// kernel: autoencoder_forward.1
$region0: #{autoencoder_forward.1}
  #allocation0 [shape = 'u32[]', space=smem, size = 0x4, offset = 0x4, fixed_abs, tag = 'smem constant byte address 0x4 - core index']
  #allocation1 [shape = 'u32[144,128]{1,0:T(1,128)}', space=vmem, size = 0x12000, scoped, tag = 'internal scratch']
  %s0 = inlined_call_operand.hbm [shape: f32[1024,256], index: 0, kind: input, shape index: {}]
  %s1 = inlined_call_operand.hbm [shape: bf16[256,128], index: 1, kind: input, shape index: {}]
  %s2 = inlined_call_operand.vmem [shape: f32[1,128], index: 2, kind: input, shape index: {}]
  %s3 = inlined_call_operand.hbm [shape: bf16[128,256], index: 3, kind: input, shape index: {}]
  %s4 = inlined_call_operand.vmem [shape: f32[1,256], index: 4, kind: input, shape index: {}]
  %s5 = inlined_call_operand.hbm [shape: f32[1024,256], index: 5, kind: output, shape index: {}]
  %s6 = sld [smem:[#allocation0]]
  $region65: #{autoencoder_forward.1} parent=0
    _
  %s8 = ssub.s32 1, %s6
  %s9 = scalar_select 0, %s8, %s6
  $region1: #{autoencoder_forward.1} parent=0
    #allocation2 [shape = 'u8[1048576]{0}', space=vmem, size = 0x100000, scoped, tag = 'input window, operand 0']
    #allocation3 [shape = 's32[2]{0}', space=sflag, size = 0x8, scoped, tag = 'scoped memory for autoencoder_forward.1']
    #allocation4 [shape = 's32[2]{0}', space=sflag, size = 0x8, scoped, tag = 'scoped memory for autoencoder_forward.1']
    #allocation5 [shape = 'u8[65536]{0}', space=vmem, size = 0x10000, scoped, tag = 'input window, operand 1, single buffered']
    #allocation6 [shape = 's32[1]{0}', space=sflag, size = 0x4, scoped, tag = 'scoped memory for autoencoder_forward.1']
    #allocation7 [shape = 'u8[65536]{0}', space=vmem, size = 0x10000, scoped, tag = 'input window, operand 3, single buffered']
    #allocation8 [shape = 'u8[1048576]{0}', space=vmem, size = 0x100000, scoped, tag = 'output window, operand 0']
    %10 = vsyncpa [#allocation3], 0
    %s11 = scalar_lea.sflag [#allocation3], 1
    %12 = vsyncpa %s11, 0
    %13 = vsyncpa [#allocation6], 0
    %14 = vsyncpa [#allocation4], 0
    %s15 = scalar_lea.sflag [#allocation4], 1
    %16 = vsyncpa %s15, 0
    loop: start=0, step=1, limit=4
    $region2: #{autoencoder_forward.1} parent=1 // loop_pre_header
      _
    $region3: #{autoencoder_forward.1} parent=1 // loop_header
      %s18 = sphi 0, %s22
      %p19 = scmp.ge.s32.totalorder %s18, 4
      %s28 = sphi 0, %s30
      %s31 = sphi 0, %s28
      %s32 = sphi 0, %s31
      %s48 = sphi 0, %s32
      %s52 = sphi 0, %s52
      %s54 = sphi 0, %s52
      %s55 = sphi 0, %s54
      %s69 = sphi 0, %s55
      %s73 = sphi 0, %s73
      %s75 = sphi 0, %s73
      %s76 = sphi 0, %s75
      %s90 = sphi 0, %s76
      %s94 = sphi 0, %s94
      %s96 = sphi 0, %s94
      %s97 = sphi 0, %s96
      %s111 = sphi 0, %s97
      %s115 = sphi 0, %s115
      %s117 = sphi 0, %s115
      %s118 = sphi 0, %s117
      %s132 = sphi 0, %s118
      %s138 = sphi 0, %s140
      %s141 = sphi 0, %s138
      %s142 = sphi 0, %s141
      %s158 = sphi 0, %s142
    $region4: #{autoencoder_forward.1} parent=1 // loop_header_branch
      %21 = sbr.rel (%p19) target = $region8
    $region5: #{autoencoder_forward.1} parent=1 // loop_body
      %s23 = ssub.s32 %s18, 1
      %s24 = ssub.s32 %s18, 2
      %s25 = sadd.s32 %s18, 1
      %s26 = ssub.s32 %s18, %s25
      %p27 = scmp.eq.s32.totalorder %s26, 0
      %s29 = sadd.s32 %s28, 1
      %s30 = scalar_select %p27, %s28, %s29
      %p33 = pneg %p27
      %p34 = scmp.eq.s32.totalorder %s18, 1
      %p35 = por %p33, %p34
      %p36 = scmp.ne.s32.totalorder %s28, %s31
      %p37 = scmp.eq.s32.totalorder %s18, 0
      %p38 = por %p36, %p37
      %p39 = scmp.ne.s32.totalorder %s28, %s31
      %p40 = scmp.eq.s32.totalorder %s23, 1
      %p41 = por %p39, %p40
      %p42 = scmp.ne.s32.totalorder %s31, %s32
      %p43 = scmp.eq.s32.totalorder %s23, 0
      %p44 = por %p42, %p43
      %p45 = scmp.ne.s32.totalorder %s31, %s32
      %p46 = scmp.eq.s32.totalorder %s24, 1
      %p47 = por %p45, %p46
      %p49 = scmp.ne.s32.totalorder %s32, %s48
      %p50 = scmp.eq.s32.totalorder %s24, 0
      %p51 = por %p49, %p50
      %s53 = sadd.s32 %s52, 1
      %p56 = scmp.eq.s32.totalorder %s18, 1
      %p57 = scmp.ne.s32.totalorder %s52, %s54
      %p58 = scmp.eq.s32.totalorder %s18, 0
      %p59 = por %p57, %p58
      %p60 = scmp.ne.s32.totalorder %s52, %s54
      %p61 = scmp.eq.s32.totalorder %s23, 1
      %p62 = por %p60, %p61
      %p63 = scmp.ne.s32.totalorder %s54, %s55
      %p64 = scmp.eq.s32.totalorder %s23, 0
      %p65 = por %p63, %p64
      %p66 = scmp.ne.s32.totalorder %s54, %s55
      %p67 = scmp.eq.s32.totalorder %s24, 1
      %p68 = por %p66, %p67
      %p70 = scmp.ne.s32.totalorder %s55, %s69
      %p71 = scmp.eq.s32.totalorder %s24, 0
      %p72 = por %p70, %p71
      %s74 = sadd.s32 %s73, 1
      %p77 = scmp.eq.s32.totalorder %s18, 1
      %p78 = scmp.ne.s32.totalorder %s73, %s75
      %p79 = scmp.eq.s32.totalorder %s18, 0
      %p80 = por %p78, %p79
      %p81 = scmp.ne.s32.totalorder %s73, %s75
      %p82 = scmp.eq.s32.totalorder %s23, 1
      %p83 = por %p81, %p82
      %p84 = scmp.ne.s32.totalorder %s75, %s76
      %p85 = scmp.eq.s32.totalorder %s23, 0
      %p86 = por %p84, %p85
      %p87 = scmp.ne.s32.totalorder %s75, %s76
      %p88 = scmp.eq.s32.totalorder %s24, 1
      %p89 = por %p87, %p88
      %p91 = scmp.ne.s32.totalorder %s76, %s90
      %p92 = scmp.eq.s32.totalorder %s24, 0
      %p93 = por %p91, %p92
      %s95 = sadd.s32 %s94, 1
      %p98 = scmp.eq.s32.totalorder %s18, 1
      %p99 = scmp.ne.s32.totalorder %s94, %s96
      %p100 = scmp.eq.s32.totalorder %s18, 0
      %p101 = por %p99, %p100
      %p102 = scmp.ne.s32.totalorder %s94, %s96
      %p103 = scmp.eq.s32.totalorder %s23, 1
      %p104 = por %p102, %p103
      %p105 = scmp.ne.s32.totalorder %s96, %s97
      %p106 = scmp.eq.s32.totalorder %s23, 0
      %p107 = por %p105, %p106
      %p108 = scmp.ne.s32.totalorder %s96, %s97
      %p109 = scmp.eq.s32.totalorder %s24, 1
      %p110 = por %p108, %p109
      %p112 = scmp.ne.s32.totalorder %s97, %s111
      %p113 = scmp.eq.s32.totalorder %s24, 0
      %p114 = por %p112, %p113
      %s116 = sadd.s32 %s115, 1
      %p119 = scmp.eq.s32.totalorder %s18, 1
      %p120 = scmp.ne.s32.totalorder %s115, %s117
      %p121 = scmp.eq.s32.totalorder %s18, 0
      %p122 = por %p120, %p121
      %p123 = scmp.ne.s32.totalorder %s115, %s117
      %p124 = scmp.eq.s32.totalorder %s23, 1
      %p125 = por %p123, %p124
      %p126 = scmp.ne.s32.totalorder %s117, %s118
      %p127 = scmp.eq.s32.totalorder %s23, 0
      %p128 = por %p126, %p127
      %p129 = scmp.ne.s32.totalorder %s117, %s118
      %p130 = scmp.eq.s32.totalorder %s24, 1
      %p131 = por %p129, %p130
      %p133 = scmp.ne.s32.totalorder %s118, %s132
      %p134 = scmp.eq.s32.totalorder %s24, 0
      %p135 = por %p133, %p134
      %s136 = ssub.s32 %s18, %s25
      %p137 = scmp.eq.s32.totalorder %s136, 0
      %s139 = sadd.s32 %s138, 1
      %s140 = scalar_select %p137, %s138, %s139
      %p143 = pneg %p137
      %p144 = scmp.eq.s32.totalorder %s18, 1
      %p145 = por %p143, %p144
      %p146 = scmp.ne.s32.totalorder %s138, %s141
      %p147 = scmp.eq.s32.totalorder %s18, 0
      %p148 = por %p146, %p147
      %p149 = scmp.ne.s32.totalorder %s138, %s141
      %p150 = scmp.eq.s32.totalorder %s23, 1
      %p151 = por %p149, %p150
      %p152 = scmp.ne.s32.totalorder %s141, %s142
      %p153 = scmp.eq.s32.totalorder %s23, 0
      %p154 = por %p152, %p153
      %p155 = scmp.ne.s32.totalorder %s141, %s142
      %p156 = scmp.eq.s32.totalorder %s24, 1
      %p157 = por %p155, %p156
      %p159 = scmp.ne.s32.totalorder %s142, %s158
      %p160 = scmp.eq.s32.totalorder %s24, 0
      %p161 = por %p159, %p160
      %p162 = scmp.le.s32.totalorder 1, %s18
      %p163 = scmp.lt.s32.totalorder %s18, 3
      %p164 = pnand %p162, %p163
      %p165 = pneg %p164
      // Predicated region
      $region9: #{autoencoder_forward.1} parent=5 // pred_check
        _
      $region10: #{autoencoder_forward.1} parent=5 // pred_check_branch
        %167 = sbr.rel (%p164) target = $region12
      $region11: #{autoencoder_forward.1} parent=5 // pred_region
        %s168 = ssub.s32 %s18, 1
        // Predicated region
        $region13: #{autoencoder_forward.1} parent=11 // pred_check
          %p169 = pneg %p65
        $region14: #{autoencoder_forward.1} parent=11 // pred_check_branch
          %171 = sbr.rel (%p169) target = $region16
        $region15: #{autoencoder_forward.1} parent=11 // pred_region
          %s173 = ssub.s32 2048, 2048
          %174 = vsyncadd [#allocation6], %s173
          %s175 = sshll.u32 [#allocation5], 4
          %s176 = int_to_ptr.vmem [resolvable:$true] %s175
          %181 = dma.hbm_to_vmem [thread:$0]  %s1, 2048, %s176, [#allocation6], 64, 64, 4
        $region16: #{autoencoder_forward.1} parent=11 // pred_fallthru
          _
        // Predicated region
        $region17: #{autoencoder_forward.1} parent=11 // pred_check
          %p182 = pneg %p86
        $region18: #{autoencoder_forward.1} parent=11 // pred_check_branch
          %184 = sbr.rel (%p182) target = $region20
        $region19: #{autoencoder_forward.1} parent=11 // pred_region
          _
        $region20: #{autoencoder_forward.1} parent=11 // pred_fallthru
          _
        // Predicated region
        $region21: #{autoencoder_forward.1} parent=11 // pred_check
          %p185 = pneg %p107
        $region22: #{autoencoder_forward.1} parent=11 // pred_check_branch
          %187 = sbr.rel (%p185) target = $region24
        $region23: #{autoencoder_forward.1} parent=11 // pred_region
          %s189 = ssub.s32 2048, 2048
          %190 = vsyncadd [#allocation6], %s189
          %s191 = sshll.u32 [#allocation7], 4
          %s192 = int_to_ptr.vmem [resolvable:$true] %s191
          %197 = dma.hbm_to_vmem [thread:$0]  %s3, 2048, %s192, [#allocation6], 128, 128, 8
        $region24: #{autoencoder_forward.1} parent=11 // pred_fallthru
          _
        // Predicated region
        $region25: #{autoencoder_forward.1} parent=11 // pred_check
          %p198 = pneg %p128
        $region26: #{autoencoder_forward.1} parent=11 // pred_check_branch
          %200 = sbr.rel (%p198) target = $region28
        $region27: #{autoencoder_forward.1} parent=11 // pred_region
          _
        $region28: #{autoencoder_forward.1} parent=11 // pred_fallthru
          _
      $region12: #{autoencoder_forward.1} parent=5 // pred_fallthru
        _
      %p201 = scmp.lt.s32.totalorder %s18, 2
      // Predicated region
      $region29: #{autoencoder_forward.1} parent=5 // pred_check
        %p202 = pneg %p201
      $region30: #{autoencoder_forward.1} parent=5 // pred_check_branch
        %204 = sbr.rel (%p202) target = $region32
      $region31: #{autoencoder_forward.1} parent=5 // pred_region
        // Predicated region
        $region33: #{autoencoder_forward.1} parent=31 // pred_check
          %p205 = pneg %p38
        $region34: #{autoencoder_forward.1} parent=31 // pred_check_branch
          %207 = sbr.rel (%p205) target = $region36
        $region35: #{autoencoder_forward.1} parent=31 // pred_region
          %s208 = sand.u32 %s28, 1
          %s209 = scalar_lea.sflag [#allocation3], %s208
          %s210 = sand.u32 %s28, 1
          %s211 = smul.addr %s210, 1024
          %s212 = scalar_lea.vmem [#allocation2], %s211
          %s213 = smul.u32 64, %s18
          %s215 = ssub.s32 16384, 16384
          %216 = vsyncadd %s209, %s215
          %s217 = smul.addr %s213, 2
          %s218 = smul.addr %s217, 128
          %s219 = scalar_lea.hbm %s0, %s218
          %s220 = sshll.u32 %s212, 4
          %s221 = int_to_ptr.vmem [resolvable:$true] %s220
          %226 = dma.hbm_to_vmem [thread:$0]  %s219, 16384, %s221, %s209, 256, 256, 16
        $region36: #{autoencoder_forward.1} parent=31 // pred_fallthru
          _
      $region32: #{autoencoder_forward.1} parent=5 // pred_fallthru
        _
      %p227 = scmp.le.s32.totalorder 1, %s18
      %p228 = scmp.lt.s32.totalorder %s18, 3
      %p229 = pnand %p227, %p228
      %p230 = pneg %p229
      // Predicated region
      $region37: #{autoencoder_forward.1} parent=5 // pred_check
        _
      $region38: #{autoencoder_forward.1} parent=5 // pred_check_branch
        %232 = sbr.rel (%p229) target = $region40
      $region39: #{autoencoder_forward.1} parent=5 // pred_region
        %s233 = ssub.s32 %s18, 1
        %s234 = sand.u32 %s31, 1
        %s235 = scalar_lea.sflag [#allocation3], %s234
        %s236 = sand.u32 %s31, 1
        %s237 = smul.addr %s236, 1024
        %s238 = scalar_lea.vmem [#allocation2], %s237
        // Predicated region
        $region41: #{autoencoder_forward.1} parent=39 // pred_check
          %p239 = pneg %p44
        $region42: #{autoencoder_forward.1} parent=39 // pred_check_branch
          %241 = sbr.rel (%p239) target = $region44
        $region43: #{autoencoder_forward.1} parent=39 // pred_region
          %242 = dma.done %s235, 16384
        $region44: #{autoencoder_forward.1} parent=39 // pred_fallthru
          _
        // Predicated region
        $region45: #{autoencoder_forward.1} parent=39 // pred_check
          %p243 = pneg %p65
        $region46: #{autoencoder_forward.1} parent=39 // pred_check_branch
          %245 = sbr.rel (%p243) target = $region48
        $region47: #{autoencoder_forward.1} parent=39 // pred_region
          %246 = dma.done [#allocation6], 2048
        $region48: #{autoencoder_forward.1} parent=39 // pred_fallthru
          _
        // Predicated region
        $region49: #{autoencoder_forward.1} parent=39 // pred_check
          %p247 = pneg %p107
        $region50: #{autoencoder_forward.1} parent=39 // pred_check_branch
          %249 = sbr.rel (%p247) target = $region52
        $region51: #{autoencoder_forward.1} parent=39 // pred_region
          %250 = dma.done [#allocation6], 2048
        $region52: #{autoencoder_forward.1} parent=39 // pred_fallthru
          _
        %s251 = sand.u32 %s31, 1
        %s252 = scalar_lea.sflag [#allocation3], %s251
        %s253 = sand.u32 %s31, 1
        %s254 = smul.addr %s253, 1024
        %s255 = scalar_lea.vmem [#allocation2], %s254
        %p256 = pneg %p44
        %p257 = pneg %p41
        %p258 = pneg %p65
        %p259 = pneg %p62
        %p260 = pneg %p86
        %p261 = pneg %p83
        %p262 = pneg %p107
        %p263 = pneg %p104
        %p264 = pneg %p128
        %p265 = pneg %p125
        %p266 = pneg %p154
        %p267 = pneg %p151
        %s268 = sand.u32 %s141, 1
        %s269 = scalar_lea.sflag [#allocation4], %s268
        %s270 = sand.u32 %s141, 1
        %s271 = smul.addr %s270, 1024
        %s272 = scalar_lea.vmem [#allocation8], %s271
        %s273 = smul.u32 64, %s23
        %s274 = smul.u32 64, %s23
        %v276 = vld [vmem:[%s238] sm:$0xff]
        %v277 = vld [vmem:[%s238 + $0x8] sm:$0xff]
        %v278 = vld [vmem:[%s238 + $0x10] sm:$0xff]
        %v279 = vld [vmem:[%s238 + $0x18] sm:$0xff]
        %v280 = vld [vmem:[%s238 + $0x20] sm:$0xff]
        %v281 = vld [vmem:[%s238 + $0x28] sm:$0xff]
        %v282 = vld [vmem:[%s238 + $0x30] sm:$0xff]
        %v283 = vld [vmem:[%s238 + $0x38] sm:$0xff]
        %v284 = vld [vmem:[%s238 + $0x40] sm:$0xff]
        %v285 = vld [vmem:[%s238 + $0x48] sm:$0xff]
        %v286 = vld [vmem:[%s238 + $0x50] sm:$0xff]
        %v287 = vld [vmem:[%s238 + $0x58] sm:$0xff]
        %v288 = vld [vmem:[%s238 + $0x60] sm:$0xff]
        %v289 = vld [vmem:[%s238 + $0x68] sm:$0xff]
        %v290 = vld [vmem:[%s238 + $0x70] sm:$0xff]
        %v291 = vld [vmem:[%s238 + $0x78] sm:$0xff]
        %v292 = vld [vmem:[%s238 + $0x80] sm:$0xff]
        %v293 = vld [vmem:[%s238 + $0x88] sm:$0xff]
        %v294 = vld [vmem:[%s238 + $0x90] sm:$0xff]
        %v295 = vld [vmem:[%s238 + $0x98] sm:$0xff]
        %v296 = vld [vmem:[%s238 + $0xa0] sm:$0xff]
        %v297 = vld [vmem:[%s238 + $0xa8] sm:$0xff]
        %v298 = vld [vmem:[%s238 + $0xb0] sm:$0xff]
        %v299 = vld [vmem:[%s238 + $0xb8] sm:$0xff]
        %v300 = vld [vmem:[%s238 + $0xc0] sm:$0xff]
        %v301 = vld [vmem:[%s238 + $0xc8] sm:$0xff]
        %v302 = vld [vmem:[%s238 + $0xd0] sm:$0xff]
        %v303 = vld [vmem:[%s238 + $0xd8] sm:$0xff]
        %v304 = vld [vmem:[%s238 + $0xe0] sm:$0xff]
        %v305 = vld [vmem:[%s238 + $0xe8] sm:$0xff]
        %v306 = vld [vmem:[%s238 + $0xf0] sm:$0xff]
        %v307 = vld [vmem:[%s238 + $0xf8] sm:$0xff]
        %v308 = vld [vmem:[%s238 + $0x100] sm:$0xff]
        %v309 = vld [vmem:[%s238 + $0x108] sm:$0xff]
        %v310 = vld [vmem:[%s238 + $0x110] sm:$0xff]
        %v311 = vld [vmem:[%s238 + $0x118] sm:$0xff]
        %v312 = vld [vmem:[%s238 + $0x120] sm:$0xff]
        %v313 = vld [vmem:[%s238 + $0x128] sm:$0xff]
        %v314 = vld [vmem:[%s238 + $0x130] sm:$0xff]
        %v315 = vld [vmem:[%s238 + $0x138] sm:$0xff]
        %v316 = vld [vmem:[%s238 + $0x140] sm:$0xff]
        %v317 = vld [vmem:[%s238 + $0x148] sm:$0xff]
        %v318 = vld [vmem:[%s238 + $0x150] sm:$0xff]
        %v319 = vld [vmem:[%s238 + $0x158] sm:$0xff]
        %v320 = vld [vmem:[%s238 + $0x160] sm:$0xff]
        %v321 = vld [vmem:[%s238 + $0x168] sm:$0xff]
        %v322 = vld [vmem:[%s238 + $0x170] sm:$0xff]
        %v323 = vld [vmem:[%s238 + $0x178] sm:$0xff]
        %v324 = vld [vmem:[%s238 + $0x180] sm:$0xff]
        %v325 = vld [vmem:[%s238 + $0x188] sm:$0xff]
        %v326 = vld [vmem:[%s238 + $0x190] sm:$0xff]
        %v327 = vld [vmem:[%s238 + $0x198] sm:$0xff]
        %v328 = vld [vmem:[%s238 + $0x1a0] sm:$0xff]
        %v329 = vld [vmem:[%s238 + $0x1a8] sm:$0xff]
        %v330 = vld [vmem:[%s238 + $0x1b0] sm:$0xff]
        %v331 = vld [vmem:[%s238 + $0x1b8] sm:$0xff]
        %v332 = vld [vmem:[%s238 + $0x1c0] sm:$0xff]
        %v333 = vld [vmem:[%s238 + $0x1c8] sm:$0xff]
        %v334 = vld [vmem:[%s238 + $0x1d0] sm:$0xff]
        %v335 = vld [vmem:[%s238 + $0x1d8] sm:$0xff]
        %v336 = vld [vmem:[%s238 + $0x1e0] sm:$0xff]
        %v337 = vld [vmem:[%s238 + $0x1e8] sm:$0xff]
        %v338 = vld [vmem:[%s238 + $0x1f0] sm:$0xff]
        %v339 = vld [vmem:[%s238 + $0x1f8] sm:$0xff]
        %v340 = vld [vmem:[%s238 + $0x200] sm:$0xff]
        %v341 = vld [vmem:[%s238 + $0x208] sm:$0xff]
        %v342 = vld [vmem:[%s238 + $0x210] sm:$0xff]
        %v343 = vld [vmem:[%s238 + $0x218] sm:$0xff]
        %v344 = vld [vmem:[%s238 + $0x220] sm:$0xff]
        %v345 = vld [vmem:[%s238 + $0x228] sm:$0xff]
        %v346 = vld [vmem:[%s238 + $0x230] sm:$0xff]
        %v347 = vld [vmem:[%s238 + $0x238] sm:$0xff]
        %v348 = vld [vmem:[%s238 + $0x240] sm:$0xff]
        %v349 = vld [vmem:[%s238 + $0x248] sm:$0xff]
        %v350 = vld [vmem:[%s238 + $0x250] sm:$0xff]
        %v351 = vld [vmem:[%s238 + $0x258] sm:$0xff]
        %v352 = vld [vmem:[%s238 + $0x260] sm:$0xff]
        %v353 = vld [vmem:[%s238 + $0x268] sm:$0xff]
        %v354 = vld [vmem:[%s238 + $0x270] sm:$0xff]
        %v355 = vld [vmem:[%s238 + $0x278] sm:$0xff]
        %v356 = vld [vmem:[%s238 + $0x280] sm:$0xff]
        %v357 = vld [vmem:[%s238 + $0x288] sm:$0xff]
        %v358 = vld [vmem:[%s238 + $0x290] sm:$0xff]
        %v359 = vld [vmem:[%s238 + $0x298] sm:$0xff]
        %v360 = vld [vmem:[%s238 + $0x2a0] sm:$0xff]
        %v361 = vld [vmem:[%s238 + $0x2a8] sm:$0xff]
        %v362 = vld [vmem:[%s238 + $0x2b0] sm:$0xff]
        %v363 = vld [vmem:[%s238 + $0x2b8] sm:$0xff]
        %v364 = vld [vmem:[%s238 + $0x2c0] sm:$0xff]
        %v365 = vld [vmem:[%s238 + $0x2c8] sm:$0xff]
        %v366 = vld [vmem:[%s238 + $0x2d0] sm:$0xff]
        %v367 = vld [vmem:[%s238 + $0x2d8] sm:$0xff]
        %v368 = vld [vmem:[%s238 + $0x2e0] sm:$0xff]
        %v369 = vld [vmem:[%s238 + $0x2e8] sm:$0xff]
        %v370 = vld [vmem:[%s238 + $0x2f0] sm:$0xff]
        %v371 = vld [vmem:[%s238 + $0x2f8] sm:$0xff]
        %v372 = vld [vmem:[%s238 + $0x300] sm:$0xff]
        %v373 = vld [vmem:[%s238 + $0x308] sm:$0xff]
        %v374 = vld [vmem:[%s238 + $0x310] sm:$0xff]
        %v375 = vld [vmem:[%s238 + $0x318] sm:$0xff]
        %v376 = vld [vmem:[%s238 + $0x320] sm:$0xff]
        %v377 = vld [vmem:[%s238 + $0x328] sm:$0xff]
        %v378 = vld [vmem:[%s238 + $0x330] sm:$0xff]
        %v379 = vld [vmem:[%s238 + $0x338] sm:$0xff]
        %v380 = vld [vmem:[%s238 + $0x340] sm:$0xff]
        %v381 = vld [vmem:[%s238 + $0x348] sm:$0xff]
        %v382 = vld [vmem:[%s238 + $0x350] sm:$0xff]
        %v383 = vld [vmem:[%s238 + $0x358] sm:$0xff]
        %v384 = vld [vmem:[%s238 + $0x360] sm:$0xff]
        %v385 = vld [vmem:[%s238 + $0x368] sm:$0xff]
        %v386 = vld [vmem:[%s238 + $0x370] sm:$0xff]
        %v387 = vld [vmem:[%s238 + $0x378] sm:$0xff]
        %v388 = vld [vmem:[%s238 + $0x380] sm:$0xff]
        %v389 = vld [vmem:[%s238 + $0x388] sm:$0xff]
        %v390 = vld [vmem:[%s238 + $0x390] sm:$0xff]
        %v391 = vld [vmem:[%s238 + $0x398] sm:$0xff]
        %v392 = vld [vmem:[%s238 + $0x3a0] sm:$0xff]
        %v393 = vld [vmem:[%s238 + $0x3a8] sm:$0xff]
        %v394 = vld [vmem:[%s238 + $0x3b0] sm:$0xff]
        %v395 = vld [vmem:[%s238 + $0x3b8] sm:$0xff]
        %v396 = vld [vmem:[%s238 + $0x3c0] sm:$0xff]
        %v397 = vld [vmem:[%s238 + $0x3c8] sm:$0xff]
        %v398 = vld [vmem:[%s238 + $0x3d0] sm:$0xff]
        %v399 = vld [vmem:[%s238 + $0x3d8] sm:$0xff]
        %v400 = vld [vmem:[%s238 + $0x3e0] sm:$0xff]
        %v401 = vld [vmem:[%s238 + $0x3e8] sm:$0xff]
        %v402 = vld [vmem:[%s238 + $0x3f0] sm:$0xff]
        %v403 = vld [vmem:[%s238 + $0x3f8] sm:$0xff]
        %v404 = vpack.c.bf16 %v278, %v276
        %v405 = vpack.c.bf16 %v279, %v277
        %v406 = vpack.c.bf16 %v282, %v280
        %v407 = vpack.c.bf16 %v283, %v281
        %v408 = vpack.c.bf16 %v286, %v284
        %v409 = vpack.c.bf16 %v287, %v285
        %v410 = vpack.c.bf16 %v290, %v288
        %v411 = vpack.c.bf16 %v291, %v289
        %v412 = vpack.c.bf16 %v294, %v292
        %v413 = vpack.c.bf16 %v295, %v293
        %v414 = vpack.c.bf16 %v298, %v296
        %v415 = vpack.c.bf16 %v299, %v297
        %v416 = vpack.c.bf16 %v302, %v300
        %v417 = vpack.c.bf16 %v303, %v301
        %v418 = vpack.c.bf16 %v306, %v304
        %v419 = vpack.c.bf16 %v307, %v305
        %v420 = vpack.c.bf16 %v310, %v308
        %v421 = vpack.c.bf16 %v311, %v309
        %v422 = vpack.c.bf16 %v314, %v312
        %v423 = vpack.c.bf16 %v315, %v313
        %v424 = vpack.c.bf16 %v318, %v316
        %v425 = vpack.c.bf16 %v319, %v317
        %v426 = vpack.c.bf16 %v322, %v320
        %v427 = vpack.c.bf16 %v323, %v321
        %v428 = vpack.c.bf16 %v326, %v324
        %v429 = vpack.c.bf16 %v327, %v325
        %v430 = vpack.c.bf16 %v330, %v328
        %v431 = vpack.c.bf16 %v331, %v329
        %v432 = vpack.c.bf16 %v334, %v332
        %v433 = vpack.c.bf16 %v335, %v333
        %v434 = vpack.c.bf16 %v338, %v336
        %v435 = vpack.c.bf16 %v339, %v337
        %v436 = vpack.c.bf16 %v342, %v340
        %v437 = vpack.c.bf16 %v343, %v341
        %v438 = vpack.c.bf16 %v346, %v344
        %v439 = vpack.c.bf16 %v347, %v345
        %v440 = vpack.c.bf16 %v350, %v348
        %v441 = vpack.c.bf16 %v351, %v349
        %v442 = vpack.c.bf16 %v354, %v352
        %v443 = vpack.c.bf16 %v355, %v353
        %v444 = vpack.c.bf16 %v358, %v356
        %v445 = vpack.c.bf16 %v359, %v357
        %v446 = vpack.c.bf16 %v362, %v360
        %v447 = vpack.c.bf16 %v363, %v361
        %v448 = vpack.c.bf16 %v366, %v364
        %v449 = vpack.c.bf16 %v367, %v365
        %v450 = vpack.c.bf16 %v370, %v368
        %v451 = vpack.c.bf16 %v371, %v369
        %v452 = vpack.c.bf16 %v374, %v372
        %v453 = vpack.c.bf16 %v375, %v373
        %v454 = vpack.c.bf16 %v378, %v376
        %v455 = vpack.c.bf16 %v379, %v377
        %v456 = vpack.c.bf16 %v382, %v380
        %v457 = vpack.c.bf16 %v383, %v381
        %v458 = vpack.c.bf16 %v386, %v384
        %v459 = vpack.c.bf16 %v387, %v385
        %v460 = vpack.c.bf16 %v390, %v388
        %v461 = vpack.c.bf16 %v391, %v389
        %v462 = vpack.c.bf16 %v394, %v392
        %v463 = vpack.c.bf16 %v395, %v393
        %v464 = vpack.c.bf16 %v398, %v396
        %v465 = vpack.c.bf16 %v399, %v397
        %v466 = vpack.c.bf16 %v402, %v400
        %v467 = vpack.c.bf16 %v403, %v401
        %v468 = vld [vmem:[#allocation5] sm:$0xf]
        %v469 = vld [vmem:[#allocation5 + $0x4] sm:$0xf]
        %v470 = vld [vmem:[#allocation5 + $0x8] sm:$0xf]
        %v471 = vld [vmem:[#allocation5 + $0xc] sm:$0xf]
        %v472 = vld [vmem:[#allocation5 + $0x10] sm:$0xf]
        %v473 = vld [vmem:[#allocation5 + $0x14] sm:$0xf]
        %v474 = vld [vmem:[#allocation5 + $0x18] sm:$0xf]
        %v475 = vld [vmem:[#allocation5 + $0x1c] sm:$0xf]
        %v476 = vld [vmem:[#allocation5 + $0x20] sm:$0xf]
        %v477 = vld [vmem:[#allocation5 + $0x24] sm:$0xf]
        %v478 = vld [vmem:[#allocation5 + $0x28] sm:$0xf]
        %v479 = vld [vmem:[#allocation5 + $0x2c] sm:$0xf]
        %v480 = vld [vmem:[#allocation5 + $0x30] sm:$0xf]
        %v481 = vld [vmem:[#allocation5 + $0x34] sm:$0xf]
        %v482 = vld [vmem:[#allocation5 + $0x38] sm:$0xf]
        %v483 = vld [vmem:[#allocation5 + $0x3c] sm:$0xf]
        %v484 = vld [vmem:[#allocation5 + $0x40] sm:$0xf]
        %v485 = vld [vmem:[#allocation5 + $0x44] sm:$0xf]
        %v486 = vld [vmem:[#allocation5 + $0x48] sm:$0xf]
        %v487 = vld [vmem:[#allocation5 + $0x4c] sm:$0xf]
        %v488 = vld [vmem:[#allocation5 + $0x50] sm:$0xf]
        %v489 = vld [vmem:[#allocation5 + $0x54] sm:$0xf]
        %v490 = vld [vmem:[#allocation5 + $0x58] sm:$0xf]
        %v491 = vld [vmem:[#allocation5 + $0x5c] sm:$0xf]
        %v492 = vld [vmem:[#allocation5 + $0x60] sm:$0xf]
        %v493 = vld [vmem:[#allocation5 + $0x64] sm:$0xf]
        %v494 = vld [vmem:[#allocation5 + $0x68] sm:$0xf]
        %v495 = vld [vmem:[#allocation5 + $0x6c] sm:$0xf]
        %v496 = vld [vmem:[#allocation5 + $0x70] sm:$0xf]
        %v497 = vld [vmem:[#allocation5 + $0x74] sm:$0xf]
        %v498 = vld [vmem:[#allocation5 + $0x78] sm:$0xf]
        %v499 = vld [vmem:[#allocation5 + $0x7c] sm:$0xf]
        %v500 = vld [vmem:[%s2] sm:$0x1]
        %v502 = vlaneseq
        %v503 = vshrl.u32 %v502, 7
        %v504 = vsub.s32 0, %v503
        %v505 = vrot.slane %v500, %v504
        %v539 = vunpack.c.l.b16 %v468
        %v540 = vunpack.c.l.b16 %v469
        %v541 = vunpack.c.l.b16 %v470
        %v542 = vunpack.c.l.b16 %v471
        %v543 = vunpack.c.l.b16 %v472
        %v544 = vunpack.c.l.b16 %v473
        %v545 = vunpack.c.l.b16 %v474
        %v546 = vunpack.c.l.b16 %v475
        %v547 = vunpack.c.l.b16 %v476
        %v548 = vunpack.c.l.b16 %v477
        %v549 = vunpack.c.l.b16 %v478
        %v550 = vunpack.c.l.b16 %v479
        %v551 = vunpack.c.l.b16 %v480
        %v552 = vunpack.c.l.b16 %v481
        %v553 = vunpack.c.l.b16 %v482
        %v554 = vunpack.c.l.b16 %v483
        %v555 = vunpack.c.l.b16 %v484
        %v556 = vunpack.c.l.b16 %v485
        %v557 = vunpack.c.l.b16 %v486
        %v558 = vunpack.c.l.b16 %v487
        %v559 = vunpack.c.l.b16 %v488
        %v560 = vunpack.c.l.b16 %v489
        %v561 = vunpack.c.l.b16 %v490
        %v562 = vunpack.c.l.b16 %v491
        %v563 = vunpack.c.l.b16 %v492
        %v564 = vunpack.c.l.b16 %v493
        %v565 = vunpack.c.l.b16 %v494
        %v566 = vunpack.c.l.b16 %v495
        %v567 = vunpack.c.l.b16 %v496
        %v568 = vunpack.c.l.b16 %v497
        %v569 = vunpack.c.l.b16 %v498
        %v570 = vunpack.c.l.b16 %v499
        %v571 = vpack.c.b16 %v540, %v539
        %v572 = vpack.c.b16 %v542, %v541
        %v573 = vpack.c.b16 %v544, %v543
        %v574 = vpack.c.b16 %v546, %v545
        %v575 = vpack.c.b16 %v548, %v547
        %v576 = vpack.c.b16 %v550, %v549
        %v577 = vpack.c.b16 %v552, %v551
        %v578 = vpack.c.b16 %v554, %v553
        %v579 = vpack.c.b16 %v556, %v555
        %v580 = vpack.c.b16 %v558, %v557
        %v581 = vpack.c.b16 %v560, %v559
        %v582 = vpack.c.b16 %v562, %v561
        %v583 = vpack.c.b16 %v564, %v563
        %v584 = vpack.c.b16 %v566, %v565
        %v585 = vpack.c.b16 %v568, %v567
        %v586 = vpack.c.b16 %v570, %v569
        %603 = vmatprep.subr.bf16.mxu0 0
        %604 = vmatpush1.bf16.msra.mxu0 %v571
        %605 = vmatprep.subr.bf16.mxu0 0
        %606 = vmatpush1.bf16.msra.mxu0 %v572
        %607 = vmatprep.subr.bf16.mxu0 0
        %608 = vmatpush1.bf16.msra.mxu0 %v573
        %609 = vmatprep.subr.bf16.mxu0 0
        %610 = vmatpush1.bf16.msra.mxu0 %v574
        %611 = vmatprep.subr.bf16.mxu0 0
        %612 = vmatpush1.bf16.msra.mxu0 %v575
        %613 = vmatprep.subr.bf16.mxu0 0
        %614 = vmatpush1.bf16.msra.mxu0 %v576
        %615 = vmatprep.subr.bf16.mxu0 0
        %616 = vmatpush1.bf16.msra.mxu0 %v577
        %617 = vmatprep.subr.bf16.mxu0 0
        %618 = vmatpush1.bf16.msra.mxu0 %v578
        %619 = vmatprep.subr.bf16.mxu0 0
        %620 = vmatpush1.bf16.msra.mxu0 %v579
        %621 = vmatprep.subr.bf16.mxu0 0
        %622 = vmatpush1.bf16.msra.mxu0 %v580
        %623 = vmatprep.subr.bf16.mxu0 0
        %624 = vmatpush1.bf16.msra.mxu0 %v581
        %625 = vmatprep.subr.bf16.mxu0 0
        %626 = vmatpush1.bf16.msra.mxu0 %v582
        %627 = vmatprep.subr.bf16.mxu0 0
        %628 = vmatpush1.bf16.msra.mxu0 %v583
        %629 = vmatprep.subr.bf16.mxu0 0
        %630 = vmatpush1.bf16.msra.mxu0 %v584
        %631 = vmatprep.subr.bf16.mxu0 0
        %632 = vmatpush1.bf16.msra.mxu0 %v585
        %633 = vmatprep.subr.bf16.mxu0 0
        %634 = vmatpush1.bf16.msra.mxu0 %v586
        %635 = vmatprep.mubr.bf16.mxu0 %v405
        %636 = vmatmul.mubr.bf16.gmra.mrb[0].mxu0 %v404
        %v637 = vpop.f32.mrb[0].mxu0
        %v638 = vadd.f32 %v505, %v637
        %v639 = vpop.f32.mrb[0].mxu0
        %v640 = vpop.f32.mrb[0].mxu0
        %v641 = vadd.f32 %v505, %v640
        %v642 = vpop.f32.mrb[0].mxu0
        %643 = vmatprep.mubr.bf16.mxu0 %v407
        %644 = vmatmul.mubr.bf16.gmra.mrb[0].mxu0 %v406
        %v645 = vpop.f32.mrb[0].mxu0
        %v646 = vadd.f32 %v505, %v645
        %v647 = vpop.f32.mrb[0].mxu0
        %v648 = vpop.f32.mrb[0].mxu0
        %v649 = vadd.f32 %v505, %v648
        %v650 = vpop.f32.mrb[0].mxu0
        %651 = vmatprep.mubr.bf16.mxu0 %v409
        %652 = vmatmul.mubr.bf16.gmra.mrb[0].mxu0 %v408
        %v653 = vpop.f32.mrb[0].mxu0
        %v654 = vadd.f32 %v505, %v653
        %v655 = vpop.f32.mrb[0].mxu0
        %v656 = vpop.f32.mrb[0].mxu0
        %v657 = vadd.f32 %v505, %v656
        %v658 = vpop.f32.mrb[0].mxu0
        %659 = vmatprep.mubr.bf16.mxu0 %v411
        %660 = vmatmul.mubr.bf16.gmra.mrb[0].mxu0 %v410
        %v661 = vpop.f32.mrb[0].mxu0
        %v662 = vadd.f32 %v505, %v661
        %v663 = vpop.f32.mrb[0].mxu0
        %v664 = vpop.f32.mrb[0].mxu0
        %v665 = vadd.f32 %v505, %v664
        %v666 = vpop.f32.mrb[0].mxu0
        %667 = vmatprep.mubr.bf16.mxu0 %v413
        %668 = vmatmul.mubr.bf16.gmra.mrb[0].mxu0 %v412
        %v669 = vpop.f32.mrb[0].mxu0
        %v670 = vadd.f32 %v505, %v669
        %v671 = vpop.f32.mrb[0].mxu0
        %v672 = vpop.f32.mrb[0].mxu0
        %v673 = vadd.f32 %v505, %v672
        %v674 = vpop.f32.mrb[0].mxu0
        %675 = vmatprep.mubr.bf16.mxu0 %v415
        %676 = vmatmul.mubr.bf16.gmra.mrb[0].mxu0 %v414
        %v677 = vpop.f32.mrb[0].mxu0
        %v678 = vadd.f32 %v505, %v677
        %v679 = vpop.f32.mrb[0].mxu0
        %v680 = vpop.f32.mrb[0].mxu0
        %v681 = vadd.f32 %v505, %v680
        %v682 = vpop.f32.mrb[0].mxu0
        %683 = vmatprep.mubr.bf16.mxu0 %v417
        %684 = vmatmul.mubr.bf16.gmra.mrb[0].mxu0 %v416
        %v685 = vpop.f32.mrb[0].mxu0
        %v686 = vadd.f32 %v505, %v685
        %v687 = vpop.f32.mrb[0].mxu0
        %v688 = vpop.f32.mrb[0].mxu0
        %v689 = vadd.f32 %v505, %v688
        %v690 = vpop.f32.mrb[0].mxu0
        %691 = vmatprep.mubr.bf16.mxu0 %v419
        %692 = vmatmul.mubr.bf16.gmra.mrb[0].mxu0 %v418
        %v693 = vpop.f32.mrb[0].mxu0
        %v694 = vadd.f32 %v505, %v693
        %v695 = vpop.f32.mrb[0].mxu0
        %v696 = vpop.f32.mrb[0].mxu0
        %v697 = vadd.f32 %v505, %v696
        %v698 = vpop.f32.mrb[0].mxu0
        %699 = vmatprep.mubr.bf16.mxu0 %v421
        %700 = vmatmul.mubr.bf16.gmra.mrb[0].mxu0 %v420
        %v701 = vpop.f32.mrb[0].mxu0
        %v702 = vadd.f32 %v505, %v701
        %v703 = vpop.f32.mrb[0].mxu0
        %v704 = vpop.f32.mrb[0].mxu0
        %v705 = vadd.f32 %v505, %v704
        %v706 = vpop.f32.mrb[0].mxu0
        %707 = vmatprep.mubr.bf16.mxu0 %v423
        %708 = vmatmul.mubr.bf16.gmra.mrb[0].mxu0 %v422
        %v709 = vpop.f32.mrb[0].mxu0
        %v710 = vadd.f32 %v505, %v709
        %v711 = vpop.f32.mrb[0].mxu0
        %v712 = vpop.f32.mrb[0].mxu0
        %v713 = vadd.f32 %v505, %v712
        %v714 = vpop.f32.mrb[0].mxu0
        %715 = vmatprep.mubr.bf16.mxu0 %v425
        %716 = vmatmul.mubr.bf16.gmra.mrb[0].mxu0 %v424
        %v717 = vpop.f32.mrb[0].mxu0
        %v718 = vadd.f32 %v505, %v717
        %v719 = vpop.f32.mrb[0].mxu0
        %v720 = vpop.f32.mrb[0].mxu0
        %v721 = vadd.f32 %v505, %v720
        %v722 = vpop.f32.mrb[0].mxu0
        %723 = vmatprep.mubr.bf16.mxu0 %v427
        %724 = vmatmul.mubr.bf16.gmra.mrb[0].mxu0 %v426
        %v725 = vpop.f32.mrb[0].mxu0
        %v726 = vadd.f32 %v505, %v725
        %v727 = vpop.f32.mrb[0].mxu0
        %v728 = vpop.f32.mrb[0].mxu0
        %v729 = vadd.f32 %v505, %v728
        %v730 = vpop.f32.mrb[0].mxu0
        %731 = vmatprep.mubr.bf16.mxu0 %v429
        %732 = vmatmul.mubr.bf16.gmra.mrb[0].mxu0 %v428
        %v733 = vpop.f32.mrb[0].mxu0
        %v734 = vadd.f32 %v505, %v733
        %v735 = vpop.f32.mrb[0].mxu0
        %v736 = vpop.f32.mrb[0].mxu0
        %v737 = vadd.f32 %v505, %v736
        %v738 = vpop.f32.mrb[0].mxu0
        %739 = vmatprep.mubr.bf16.mxu0 %v431
        %740 = vmatmul.mubr.bf16.gmra.mrb[0].mxu0 %v430
        %v741 = vpop.f32.mrb[0].mxu0
        %v742 = vadd.f32 %v505, %v741
        %v743 = vpop.f32.mrb[0].mxu0
        %v744 = vpop.f32.mrb[0].mxu0
        %v745 = vadd.f32 %v505, %v744
        %v746 = vpop.f32.mrb[0].mxu0
        %747 = vmatprep.mubr.bf16.mxu0 %v433
        %748 = vmatmul.mubr.bf16.gmra.mrb[0].mxu0 %v432
        %v749 = vpop.f32.mrb[0].mxu0
        %v750 = vadd.f32 %v505, %v749
        %v751 = vpop.f32.mrb[0].mxu0
        %v752 = vpop.f32.mrb[0].mxu0
        %v753 = vadd.f32 %v505, %v752
        %v754 = vpop.f32.mrb[0].mxu0
        %755 = vmatprep.mubr.bf16.mxu0 %v435
        %756 = vmatmul.mubr.bf16.gmra.mrb[0].mxu0 %v434
        %v757 = vpop.f32.mrb[0].mxu0
        %v758 = vadd.f32 %v505, %v757
        %v759 = vpop.f32.mrb[0].mxu0
        %v760 = vpop.f32.mrb[0].mxu0
        %v761 = vadd.f32 %v505, %v760
        %v762 = vpop.f32.mrb[0].mxu0
        %763 = vmatprep.mubr.bf16.mxu0 %v437
        %764 = vmatmul.mubr.bf16.gmra.mrb[0].mxu0 %v436
        %v765 = vpop.f32.mrb[0].mxu0
        %v766 = vadd.f32 %v505, %v765
        %v767 = vpop.f32.mrb[0].mxu0
        %v768 = vpop.f32.mrb[0].mxu0
        %v769 = vadd.f32 %v505, %v768
        %v770 = vpop.f32.mrb[0].mxu0
        %771 = vmatprep.mubr.bf16.mxu0 %v439
        %772 = vmatmul.mubr.bf16.gmra.mrb[0].mxu0 %v438
        %v773 = vpop.f32.mrb[0].mxu0
        %v774 = vadd.f32 %v505, %v773
        %v775 = vpop.f32.mrb[0].mxu0
        %v776 = vpop.f32.mrb[0].mxu0
        %v777 = vadd.f32 %v505, %v776
        %v778 = vpop.f32.mrb[0].mxu0
        %779 = vmatprep.mubr.bf16.mxu0 %v441
        %780 = vmatmul.mubr.bf16.gmra.mrb[0].mxu0 %v440
        %v781 = vpop.f32.mrb[0].mxu0
        %v782 = vadd.f32 %v505, %v781
        %v783 = vpop.f32.mrb[0].mxu0
        %v784 = vpop.f32.mrb[0].mxu0
        %v785 = vadd.f32 %v505, %v784
        %v786 = vpop.f32.mrb[0].mxu0
        %787 = vmatprep.mubr.bf16.mxu0 %v443
        %788 = vmatmul.mubr.bf16.gmra.mrb[0].mxu0 %v442
        %v789 = vpop.f32.mrb[0].mxu0
        %v790 = vadd.f32 %v505, %v789
        %v791 = vpop.f32.mrb[0].mxu0
        %v792 = vpop.f32.mrb[0].mxu0
        %v793 = vadd.f32 %v505, %v792
        %v794 = vpop.f32.mrb[0].mxu0
        %795 = vmatprep.mubr.bf16.mxu0 %v445
        %796 = vmatmul.mubr.bf16.gmra.mrb[0].mxu0 %v444
        %v797 = vpop.f32.mrb[0].mxu0
        %v798 = vadd.f32 %v505, %v797
        %v799 = vpop.f32.mrb[0].mxu0
        %v800 = vpop.f32.mrb[0].mxu0
        %v801 = vadd.f32 %v505, %v800
        %v802 = vpop.f32.mrb[0].mxu0
        %803 = vmatprep.mubr.bf16.mxu0 %v447
        %804 = vmatmul.mubr.bf16.gmra.mrb[0].mxu0 %v446
        %v805 = vpop.f32.mrb[0].mxu0
        %v806 = vadd.f32 %v505, %v805
        %v807 = vpop.f32.mrb[0].mxu0
        %v808 = vpop.f32.mrb[0].mxu0
        %v809 = vadd.f32 %v505, %v808
        %v810 = vpop.f32.mrb[0].mxu0
        %811 = vmatprep.mubr.bf16.mxu0 %v449
        %812 = vmatmul.mubr.bf16.gmra.mrb[0].mxu0 %v448
        %v813 = vpop.f32.mrb[0].mxu0
        %v814 = vadd.f32 %v505, %v813
        %v815 = vpop.f32.mrb[0].mxu0
        %v816 = vpop.f32.mrb[0].mxu0
        %v817 = vadd.f32 %v505, %v816
        %v818 = vpop.f32.mrb[0].mxu0
        %819 = vmatprep.mubr.bf16.mxu0 %v451
        %820 = vmatmul.mubr.bf16.gmra.mrb[0].mxu0 %v450
        %v821 = vpop.f32.mrb[0].mxu0
        %v822 = vadd.f32 %v505, %v821
        %v823 = vpop.f32.mrb[0].mxu0
        %v824 = vpop.f32.mrb[0].mxu0
        %v825 = vadd.f32 %v505, %v824
        %v826 = vpop.f32.mrb[0].mxu0
        %827 = vmatprep.mubr.bf16.mxu0 %v453
        %828 = vmatmul.mubr.bf16.gmra.mrb[0].mxu0 %v452
        %v829 = vpop.f32.mrb[0].mxu0
        %v830 = vadd.f32 %v505, %v829
        %v831 = vpop.f32.mrb[0].mxu0
        %v832 = vpop.f32.mrb[0].mxu0
        %v833 = vadd.f32 %v505, %v832
        %v834 = vpop.f32.mrb[0].mxu0
        %835 = vmatprep.mubr.bf16.mxu0 %v455
        %836 = vmatmul.mubr.bf16.gmra.mrb[0].mxu0 %v454
        %v837 = vpop.f32.mrb[0].mxu0
        %v838 = vadd.f32 %v505, %v837
        %v839 = vpop.f32.mrb[0].mxu0
        %v840 = vpop.f32.mrb[0].mxu0
        %v841 = vadd.f32 %v505, %v840
        %v842 = vpop.f32.mrb[0].mxu0
        %843 = vmatprep.mubr.bf16.mxu0 %v457
        %844 = vmatmul.mubr.bf16.gmra.mrb[0].mxu0 %v456
        %v845 = vpop.f32.mrb[0].mxu0
        %v846 = vadd.f32 %v505, %v845
        %v847 = vpop.f32.mrb[0].mxu0
        %v848 = vpop.f32.mrb[0].mxu0
        %v849 = vadd.f32 %v505, %v848
        %v850 = vpop.f32.mrb[0].mxu0
        %851 = vmatprep.mubr.bf16.mxu0 %v459
        %852 = vmatmul.mubr.bf16.gmra.mrb[0].mxu0 %v458
        %v853 = vpop.f32.mrb[0].mxu0
        %v854 = vadd.f32 %v505, %v853
        %v855 = vpop.f32.mrb[0].mxu0
        %v856 = vpop.f32.mrb[0].mxu0
        %v857 = vadd.f32 %v505, %v856
        %v858 = vpop.f32.mrb[0].mxu0
        %859 = vmatprep.mubr.bf16.mxu0 %v461
        %860 = vmatmul.mubr.bf16.gmra.mrb[0].mxu0 %v460
        %v861 = vpop.f32.mrb[0].mxu0
        %v862 = vadd.f32 %v505, %v861
        %v863 = vpop.f32.mrb[0].mxu0
        %v864 = vpop.f32.mrb[0].mxu0
        %v865 = vadd.f32 %v505, %v864
        %v866 = vpop.f32.mrb[0].mxu0
        %867 = vmatprep.mubr.bf16.mxu0 %v463
        %868 = vmatmul.mubr.bf16.gmra.mrb[0].mxu0 %v462
        %v869 = vpop.f32.mrb[0].mxu0
        %v870 = vadd.f32 %v505, %v869
        %v871 = vpop.f32.mrb[0].mxu0
        %v872 = vpop.f32.mrb[0].mxu0
        %v873 = vadd.f32 %v505, %v872
        %v874 = vpop.f32.mrb[0].mxu0
        %875 = vmatprep.mubr.bf16.mxu0 %v465
        %876 = vmatmul.mubr.bf16.gmra.mrb[0].mxu0 %v464
        %v877 = vpop.f32.mrb[0].mxu0
        %v878 = vadd.f32 %v505, %v877
        %v879 = vpop.f32.mrb[0].mxu0
        %v880 = vpop.f32.mrb[0].mxu0
        %v881 = vadd.f32 %v505, %v880
        %v882 = vpop.f32.mrb[0].mxu0
        %883 = vmatprep.mubr.bf16.mxu0 %v467
        %884 = vmatmul.mubr.bf16.gmra.mrb[0].mxu0 %v466
        %v885 = vpop.f32.mrb[0].mxu0
        %v886 = vadd.f32 %v505, %v885
        %v887 = vpop.f32.mrb[0].mxu0
        %v888 = vpop.f32.mrb[0].mxu0
        %v889 = vadd.f32 %v505, %v888
        %v890 = vpop.f32.mrb[0].mxu0
        %891 = vdwg.mxu0
        %v892 = vmax.f32 %v638, 0.0
        %v893 = vmax.f32 %v641, 0.0
        %v894 = vmax.f32 %v646, 0.0
        %v895 = vmax.f32 %v649, 0.0
        %v896 = vmax.f32 %v654, 0.0
        %v897 = vmax.f32 %v657, 0.0
        %v898 = vmax.f32 %v662, 0.0
        %v899 = vmax.f32 %v665, 0.0
        %v900 = vmax.f32 %v670, 0.0
        %v901 = vmax.f32 %v673, 0.0
        %v902 = vmax.f32 %v678, 0.0
        %v903 = vmax.f32 %v681, 0.0
        %v904 = vmax.f32 %v686, 0.0
        %v905 = vmax.f32 %v689, 0.0
        %v906 = vmax.f32 %v694, 0.0
        %v907 = vmax.f32 %v697, 0.0
        %v908 = vmax.f32 %v702, 0.0
        %v909 = vmax.f32 %v705, 0.0
        %v910 = vmax.f32 %v710, 0.0
        %v911 = vmax.f32 %v713, 0.0
        %v912 = vmax.f32 %v718, 0.0
        %v913 = vmax.f32 %v721, 0.0
        %v914 = vmax.f32 %v726, 0.0
        %v915 = vmax.f32 %v729, 0.0
        %v916 = vmax.f32 %v734, 0.0
        %v917 = vmax.f32 %v737, 0.0
        %v918 = vmax.f32 %v742, 0.0
        %v919 = vmax.f32 %v745, 0.0
        %v920 = vmax.f32 %v750, 0.0
        %v921 = vmax.f32 %v753, 0.0
        %v922 = vmax.f32 %v758, 0.0
        %v923 = vmax.f32 %v761, 0.0
        %v924 = vmax.f32 %v766, 0.0
        %v925 = vmax.f32 %v769, 0.0
        %v926 = vmax.f32 %v774, 0.0
        %v927 = vmax.f32 %v777, 0.0
        %v928 = vmax.f32 %v782, 0.0
        %v929 = vmax.f32 %v785, 0.0
        %v930 = vmax.f32 %v790, 0.0
        %v931 = vmax.f32 %v793, 0.0
        %v932 = vmax.f32 %v798, 0.0
        %v933 = vmax.f32 %v801, 0.0
        %v934 = vmax.f32 %v806, 0.0
        %v935 = vmax.f32 %v809, 0.0
        %v936 = vmax.f32 %v814, 0.0
        %v937 = vmax.f32 %v817, 0.0
        %v938 = vmax.f32 %v822, 0.0
        %v939 = vmax.f32 %v825, 0.0
        %v940 = vmax.f32 %v830, 0.0
        %v941 = vmax.f32 %v833, 0.0
        %v942 = vmax.f32 %v838, 0.0
        %v943 = vmax.f32 %v841, 0.0
        %v944 = vmax.f32 %v846, 0.0
        %v945 = vmax.f32 %v849, 0.0
        %v946 = vmax.f32 %v854, 0.0
        %v947 = vmax.f32 %v857, 0.0
        %v948 = vmax.f32 %v862, 0.0
        %v949 = vmax.f32 %v865, 0.0
        %v950 = vmax.f32 %v870, 0.0
        %v951 = vmax.f32 %v873, 0.0
        %v952 = vmax.f32 %v878, 0.0
        %v953 = vmax.f32 %v881, 0.0
        %v954 = vmax.f32 %v886, 0.0
        %v955 = vmax.f32 %v889, 0.0
        %v956 = vpack.c.bf16 %v893, %v892
        %v957 = vpack.c.bf16 %v895, %v894
        %v958 = vpack.c.bf16 %v897, %v896
        %v959 = vpack.c.bf16 %v899, %v898
        %v960 = vpack.c.bf16 %v901, %v900
        %v961 = vpack.c.bf16 %v903, %v902
        %v962 = vpack.c.bf16 %v905, %v904
        %v963 = vpack.c.bf16 %v907, %v906
        %v964 = vpack.c.bf16 %v909, %v908
        %v965 = vpack.c.bf16 %v911, %v910
        %v966 = vpack.c.bf16 %v913, %v912
        %v967 = vpack.c.bf16 %v915, %v914
        %v968 = vpack.c.bf16 %v917, %v916
        %v969 = vpack.c.bf16 %v919, %v918
        %v970 = vpack.c.bf16 %v921, %v920
        %v971 = vpack.c.bf16 %v923, %v922
        %v972 = vpack.c.bf16 %v925, %v924
        %v973 = vpack.c.bf16 %v927, %v926
        %v974 = vpack.c.bf16 %v929, %v928
        %v975 = vpack.c.bf16 %v931, %v930
        %v976 = vpack.c.bf16 %v933, %v932
        %v977 = vpack.c.bf16 %v935, %v934
        %v978 = vpack.c.bf16 %v937, %v936
        %v979 = vpack.c.bf16 %v939, %v938
        %v980 = vpack.c.bf16 %v941, %v940
        %v981 = vpack.c.bf16 %v943, %v942
        %v982 = vpack.c.bf16 %v945, %v944
        %v983 = vpack.c.bf16 %v947, %v946
        %v984 = vpack.c.bf16 %v949, %v948
        %v985 = vpack.c.bf16 %v951, %v950
        %v986 = vpack.c.bf16 %v953, %v952
        %v987 = vpack.c.bf16 %v955, %v954
        %v988 = vld [vmem:[#allocation7] sm:$0xff]
        %v989 = vld [vmem:[#allocation7 + $0x8] sm:$0xff]
        %v990 = vld [vmem:[#allocation7 + $0x10] sm:$0xff]
        %v991 = vld [vmem:[#allocation7 + $0x18] sm:$0xff]
        %v992 = vld [vmem:[#allocation7 + $0x20] sm:$0xff]
        %v993 = vld [vmem:[#allocation7 + $0x28] sm:$0xff]
        %v994 = vld [vmem:[#allocation7 + $0x30] sm:$0xff]
        %v995 = vld [vmem:[#allocation7 + $0x38] sm:$0xff]
        %v996 = vld [vmem:[#allocation7 + $0x40] sm:$0xff]
        %v997 = vld [vmem:[#allocation7 + $0x48] sm:$0xff]
        %v998 = vld [vmem:[#allocation7 + $0x50] sm:$0xff]
        %v999 = vld [vmem:[#allocation7 + $0x58] sm:$0xff]
        %v1000 = vld [vmem:[#allocation7 + $0x60] sm:$0xff]
        %v1001 = vld [vmem:[#allocation7 + $0x68] sm:$0xff]
        %v1002 = vld [vmem:[#allocation7 + $0x70] sm:$0xff]
        %v1003 = vld [vmem:[#allocation7 + $0x78] sm:$0xff]
        %v1004 = vld [vmem:[%s4] sm:$0x3]
        %v1006 = vlaneseq
        %v1007 = vshrl.u32 %v1006, 7
        %v1008 = vsub.s32 0, %v1007
        %v1009 = vrot.slane %v1004, %v1008
        %v1010 = vlaneseq
        %v1011 = vshrl.u32 %v1010, 7
        %v1012 = vsub.s32 1, %v1011
        %v1013 = vrot.slane %v1004, %v1012
        %v1032 = vunpack.c.l.b16 %v988
        %v1033 = vunpack.c.h.b16 %v988
        %v1034 = vunpack.c.l.b16 %v989
        %v1035 = vunpack.c.h.b16 %v989
        %v1036 = vunpack.c.l.b16 %v990
        %v1037 = vunpack.c.h.b16 %v990
        %v1038 = vunpack.c.l.b16 %v991
        %v1039 = vunpack.c.h.b16 %v991
        %v1040 = vunpack.c.l.b16 %v992
        %v1041 = vunpack.c.h.b16 %v992
        %v1042 = vunpack.c.l.b16 %v993
        %v1043 = vunpack.c.h.b16 %v993
        %v1044 = vunpack.c.l.b16 %v994
        %v1045 = vunpack.c.h.b16 %v994
        %v1046 = vunpack.c.l.b16 %v995
        %v1047 = vunpack.c.h.b16 %v995
        %v1048 = vunpack.c.l.b16 %v996
        %v1049 = vunpack.c.h.b16 %v996
        %v1050 = vunpack.c.l.b16 %v997
        %v1051 = vunpack.c.h.b16 %v997
        %v1052 = vunpack.c.l.b16 %v998
        %v1053 = vunpack.c.h.b16 %v998
        %v1054 = vunpack.c.l.b16 %v999
        %v1055 = vunpack.c.h.b16 %v999
        %v1056 = vunpack.c.l.b16 %v1000
        %v1057 = vunpack.c.h.b16 %v1000
        %v1058 = vunpack.c.l.b16 %v1001
        %v1059 = vunpack.c.h.b16 %v1001
        %v1060 = vunpack.c.l.b16 %v1002
        %v1061 = vunpack.c.h.b16 %v1002
        %v1062 = vunpack.c.l.b16 %v1003
        %v1063 = vunpack.c.h.b16 %v1003
        %v1064 = vpack.c.b16 %v1034, %v1032
        %v1065 = vpack.c.b16 %v1035, %v1033
        %v1066 = vpack.c.b16 %v1038, %v1036
        %v1067 = vpack.c.b16 %v1039, %v1037
        %v1068 = vpack.c.b16 %v1042, %v1040
        %v1069 = vpack.c.b16 %v1043, %v1041
        %v1070 = vpack.c.b16 %v1046, %v1044
        %v1071 = vpack.c.b16 %v1047, %v1045
        %v1072 = vpack.c.b16 %v1050, %v1048
        %v1073 = vpack.c.b16 %v1051, %v1049
        %v1074 = vpack.c.b16 %v1054, %v1052
        %v1075 = vpack.c.b16 %v1055, %v1053
        %v1076 = vpack.c.b16 %v1058, %v1056
        %v1077 = vpack.c.b16 %v1059, %v1057
        %v1078 = vpack.c.b16 %v1062, %v1060
        %v1079 = vpack.c.b16 %v1063, %v1061
        %1096 = vmatprep.subr.bf16.mxu0 %v1065
        %1097 = vmatpush1.bf16.msra.mxu0 %v1064
        %1098 = vmatprep.subr.bf16.mxu0 %v1067
        %1099 = vmatpush1.bf16.msra.mxu0 %v1066
        %1100 = vmatprep.subr.bf16.mxu0 %v1069
        %1101 = vmatpush1.bf16.msra.mxu0 %v1068
        %1102 = vmatprep.subr.bf16.mxu0 %v1071
        %1103 = vmatpush1.bf16.msra.mxu0 %v1070
        %1104 = vmatprep.subr.bf16.mxu0 %v1073
        %1105 = vmatpush1.bf16.msra.mxu0 %v1072
        %1106 = vmatprep.subr.bf16.mxu0 %v1075
        %1107 = vmatpush1.bf16.msra.mxu0 %v1074
        %1108 = vmatprep.subr.bf16.mxu0 %v1077
        %1109 = vmatpush1.bf16.msra.mxu0 %v1076
        %1110 = vmatprep.subr.bf16.mxu0 %v1079
        %1111 = vmatpush1.bf16.msra.mxu0 %v1078
        %1112 = vmatprep.subr.bf16.mxu0 0
        %1113 = vmatpush1.bf16.msra.mxu0 0
        %1114 = vmatprep.subr.bf16.mxu0 0
        %1115 = vmatpush1.bf16.msra.mxu0 0
        %1116 = vmatprep.subr.bf16.mxu0 0
        %1117 = vmatpush1.bf16.msra.mxu0 0
        %1118 = vmatprep.subr.bf16.mxu0 0
        %1119 = vmatpush1.bf16.msra.mxu0 0
        %1120 = vmatprep.subr.bf16.mxu0 0
        %1121 = vmatpush1.bf16.msra.mxu0 0
        %1122 = vmatprep.subr.bf16.mxu0 0
        %1123 = vmatpush1.bf16.msra.mxu0 0
        %1124 = vmatprep.subr.bf16.mxu0 0
        %1125 = vmatpush1.bf16.msra.mxu0 0
        %1126 = vmatprep.subr.bf16.mxu0 0
        %1127 = vmatpush1.bf16.msra.mxu0 0
        %1128 = vmatprep.mubr.bf16.mxu0 0
        %1129 = vmatmul.mubr.bf16.gmra.mrb[0].mxu0 %v956
        %v1130 = vpop.f32.mrb[0].mxu0
        %v1131 = vadd.f32 %v1009, %v1130
        %v1132 = vpop.f32.mrb[0].mxu0
        %v1133 = vadd.f32 %v1013, %v1132
        %v1134 = vpop.f32.mrb[0].mxu0
        %v1135 = vadd.f32 %v1009, %v1134
        %v1136 = vpop.f32.mrb[0].mxu0
        %v1137 = vadd.f32 %v1013, %v1136
        %1138 = vmatprep.mubr.bf16.mxu0 0
        %1139 = vmatmul.mubr.bf16.gmra.mrb[0].mxu0 %v957
        %v1140 = vpop.f32.mrb[0].mxu0
        %v1141 = vadd.f32 %v1009, %v1140
        %v1142 = vpop.f32.mrb[0].mxu0
        %v1143 = vadd.f32 %v1013, %v1142
        %v1144 = vpop.f32.mrb[0].mxu0
        %v1145 = vadd.f32 %v1009, %v1144
        %v1146 = vpop.f32.mrb[0].mxu0
        %v1147 = vadd.f32 %v1013, %v1146
        %1148 = vmatprep.mubr.bf16.mxu0 0
        %1149 = vmatmul.mubr.bf16.gmra.mrb[0].mxu0 %v958
        %v1150 = vpop.f32.mrb[0].mxu0
        %v1151 = vadd.f32 %v1009, %v1150
        %v1152 = vpop.f32.mrb[0].mxu0
        %v1153 = vadd.f32 %v1013, %v1152
        %v1154 = vpop.f32.mrb[0].mxu0
        %v1155 = vadd.f32 %v1009, %v1154
        %v1156 = vpop.f32.mrb[0].mxu0
        %v1157 = vadd.f32 %v1013, %v1156
        %1158 = vmatprep.mubr.bf16.mxu0 0
        %1159 = vmatmul.mubr.bf16.gmra.mrb[0].mxu0 %v959
        %v1160 = vpop.f32.mrb[0].mxu0
        %v1161 = vadd.f32 %v1009, %v1160
        %v1162 = vpop.f32.mrb[0].mxu0
        %v1163 = vadd.f32 %v1013, %v1162
        %v1164 = vpop.f32.mrb[0].mxu0
        %v1165 = vadd.f32 %v1009, %v1164
        %v1166 = vpop.f32.mrb[0].mxu0
        %v1167 = vadd.f32 %v1013, %v1166
        %1168 = vmatprep.mubr.bf16.mxu0 0
        %1169 = vmatmul.mubr.bf16.gmra.mrb[0].mxu0 %v960
        %v1170 = vpop.f32.mrb[0].mxu0
        %v1171 = vadd.f32 %v1009, %v1170
        %v1172 = vpop.f32.mrb[0].mxu0
        %v1173 = vadd.f32 %v1013, %v1172
        %v1174 = vpop.f32.mrb[0].mxu0
        %v1175 = vadd.f32 %v1009, %v1174
        %v1176 = vpop.f32.mrb[0].mxu0
        %v1177 = vadd.f32 %v1013, %v1176
        %1178 = vmatprep.mubr.bf16.mxu0 0
        %1179 = vmatmul.mubr.bf16.gmra.mrb[0].mxu0 %v961
        %v1180 = vpop.f32.mrb[0].mxu0
        %v1181 = vadd.f32 %v1009, %v1180
        %v1182 = vpop.f32.mrb[0].mxu0
        %v1183 = vadd.f32 %v1013, %v1182
        %v1184 = vpop.f32.mrb[0].mxu0
        %v1185 = vadd.f32 %v1009, %v1184
        %v1186 = vpop.f32.mrb[0].mxu0
        %v1187 = vadd.f32 %v1013, %v1186
        %1188 = vmatprep.mubr.bf16.mxu0 0
        %1189 = vmatmul.mubr.bf16.gmra.mrb[0].mxu0 %v962
        %v1190 = vpop.f32.mrb[0].mxu0
        %v1191 = vadd.f32 %v1009, %v1190
        %v1192 = vpop.f32.mrb[0].mxu0
        %v1193 = vadd.f32 %v1013, %v1192
        %v1194 = vpop.f32.mrb[0].mxu0
        %v1195 = vadd.f32 %v1009, %v1194
        %v1196 = vpop.f32.mrb[0].mxu0
        %v1197 = vadd.f32 %v1013, %v1196
        %1198 = vmatprep.mubr.bf16.mxu0 0
        %1199 = vmatmul.mubr.bf16.gmra.mrb[0].mxu0 %v963
        %v1200 = vpop.f32.mrb[0].mxu0
        %v1201 = vadd.f32 %v1009, %v1200
        %v1202 = vpop.f32.mrb[0].mxu0
        %v1203 = vadd.f32 %v1013, %v1202
        %v1204 = vpop.f32.mrb[0].mxu0
        %v1205 = vadd.f32 %v1009, %v1204
        %v1206 = vpop.f32.mrb[0].mxu0
        %v1207 = vadd.f32 %v1013, %v1206
        %1208 = vmatprep.mubr.bf16.mxu0 0
        %1209 = vmatmul.mubr.bf16.gmra.mrb[0].mxu0 %v964
        %v1210 = vpop.f32.mrb[0].mxu0
        %v1211 = vadd.f32 %v1009, %v1210
        %v1212 = vpop.f32.mrb[0].mxu0
        %v1213 = vadd.f32 %v1013, %v1212
        %v1214 = vpop.f32.mrb[0].mxu0
        %v1215 = vadd.f32 %v1009, %v1214
        %v1216 = vpop.f32.mrb[0].mxu0
        %v1217 = vadd.f32 %v1013, %v1216
        %1218 = vmatprep.mubr.bf16.mxu0 0
        %1219 = vmatmul.mubr.bf16.gmra.mrb[0].mxu0 %v965
        %v1220 = vpop.f32.mrb[0].mxu0
        %v1221 = vadd.f32 %v1009, %v1220
        %v1222 = vpop.f32.mrb[0].mxu0
        %v1223 = vadd.f32 %v1013, %v1222
        %v1224 = vpop.f32.mrb[0].mxu0
        %v1225 = vadd.f32 %v1009, %v1224
        %v1226 = vpop.f32.mrb[0].mxu0
        %v1227 = vadd.f32 %v1013, %v1226
        %1228 = vmatprep.mubr.bf16.mxu0 0
        %1229 = vmatmul.mubr.bf16.gmra.mrb[0].mxu0 %v966
        %v1230 = vpop.f32.mrb[0].mxu0
        %v1231 = vadd.f32 %v1009, %v1230
        %v1232 = vpop.f32.mrb[0].mxu0
        %v1233 = vadd.f32 %v1013, %v1232
        %v1234 = vpop.f32.mrb[0].mxu0
        %v1235 = vadd.f32 %v1009, %v1234
        %v1236 = vpop.f32.mrb[0].mxu0
        %v1237 = vadd.f32 %v1013, %v1236
        %1238 = vmatprep.mubr.bf16.mxu0 0
        %1239 = vmatmul.mubr.bf16.gmra.mrb[0].mxu0 %v967
        %v1240 = vpop.f32.mrb[0].mxu0
        %v1241 = vadd.f32 %v1009, %v1240
        %v1242 = vpop.f32.mrb[0].mxu0
        %v1243 = vadd.f32 %v1013, %v1242
        %v1244 = vpop.f32.mrb[0].mxu0
        %v1245 = vadd.f32 %v1009, %v1244
        %v1246 = vpop.f32.mrb[0].mxu0
        %v1247 = vadd.f32 %v1013, %v1246
        %1248 = vmatprep.mubr.bf16.mxu0 0
        %1249 = vmatmul.mubr.bf16.gmra.mrb[0].mxu0 %v968
        %v1250 = vpop.f32.mrb[0].mxu0
        %v1251 = vadd.f32 %v1009, %v1250
        %v1252 = vpop.f32.mrb[0].mxu0
        %v1253 = vadd.f32 %v1013, %v1252
        %v1254 = vpop.f32.mrb[0].mxu0
        %v1255 = vadd.f32 %v1009, %v1254
        %v1256 = vpop.f32.mrb[0].mxu0
        %v1257 = vadd.f32 %v1013, %v1256
        %1258 = vmatprep.mubr.bf16.mxu0 0
        %1259 = vmatmul.mubr.bf16.gmra.mrb[0].mxu0 %v969
        %v1260 = vpop.f32.mrb[0].mxu0
        %v1261 = vadd.f32 %v1009, %v1260
        %v1262 = vpop.f32.mrb[0].mxu0
        %v1263 = vadd.f32 %v1013, %v1262
        %v1264 = vpop.f32.mrb[0].mxu0
        %v1265 = vadd.f32 %v1009, %v1264
        %v1266 = vpop.f32.mrb[0].mxu0
        %v1267 = vadd.f32 %v1013, %v1266
        %1268 = vmatprep.mubr.bf16.mxu0 0
        %1269 = vmatmul.mubr.bf16.gmra.mrb[0].mxu0 %v970
        %v1270 = vpop.f32.mrb[0].mxu0
        %v1271 = vadd.f32 %v1009, %v1270
        %v1272 = vpop.f32.mrb[0].mxu0
        %v1273 = vadd.f32 %v1013, %v1272
        %v1274 = vpop.f32.mrb[0].mxu0
        %v1275 = vadd.f32 %v1009, %v1274
        %v1276 = vpop.f32.mrb[0].mxu0
        %v1277 = vadd.f32 %v1013, %v1276
        %1278 = vmatprep.mubr.bf16.mxu0 0
        %1279 = vmatmul.mubr.bf16.gmra.mrb[0].mxu0 %v971
        %v1280 = vpop.f32.mrb[0].mxu0
        %v1281 = vadd.f32 %v1009, %v1280
        %v1282 = vpop.f32.mrb[0].mxu0
        %v1283 = vadd.f32 %v1013, %v1282
        %v1284 = vpop.f32.mrb[0].mxu0
        %v1285 = vadd.f32 %v1009, %v1284
        %v1286 = vpop.f32.mrb[0].mxu0
        %v1287 = vadd.f32 %v1013, %v1286
        %1288 = vmatprep.mubr.bf16.mxu0 0
        %1289 = vmatmul.mubr.bf16.gmra.mrb[0].mxu0 %v972
        %v1290 = vpop.f32.mrb[0].mxu0
        %v1291 = vadd.f32 %v1009, %v1290
        %v1292 = vpop.f32.mrb[0].mxu0
        %v1293 = vadd.f32 %v1013, %v1292
        %v1294 = vpop.f32.mrb[0].mxu0
        %v1295 = vadd.f32 %v1009, %v1294
        %v1296 = vpop.f32.mrb[0].mxu0
        %v1297 = vadd.f32 %v1013, %v1296
        %1298 = vmatprep.mubr.bf16.mxu0 0
        %1299 = vmatmul.mubr.bf16.gmra.mrb[0].mxu0 %v973
        %v1300 = vpop.f32.mrb[0].mxu0
        %v1301 = vadd.f32 %v1009, %v1300
        %v1302 = vpop.f32.mrb[0].mxu0
        %v1303 = vadd.f32 %v1013, %v1302
        %v1304 = vpop.f32.mrb[0].mxu0
        %v1305 = vadd.f32 %v1009, %v1304
        %v1306 = vpop.f32.mrb[0].mxu0
        %v1307 = vadd.f32 %v1013, %v1306
        %1308 = vmatprep.mubr.bf16.mxu0 0
        %1309 = vmatmul.mubr.bf16.gmra.mrb[0].mxu0 %v974
        %v1310 = vpop.f32.mrb[0].mxu0
        %v1311 = vadd.f32 %v1009, %v1310
        %v1312 = vpop.f32.mrb[0].mxu0
        %v1313 = vadd.f32 %v1013, %v1312
        %v1314 = vpop.f32.mrb[0].mxu0
        %v1315 = vadd.f32 %v1009, %v1314
        %v1316 = vpop.f32.mrb[0].mxu0
        %v1317 = vadd.f32 %v1013, %v1316
        %1318 = vmatprep.mubr.bf16.mxu0 0
        %1319 = vmatmul.mubr.bf16.gmra.mrb[0].mxu0 %v975
        %v1320 = vpop.f32.mrb[0].mxu0
        %v1321 = vadd.f32 %v1009, %v1320
        %v1322 = vpop.f32.mrb[0].mxu0
        %v1323 = vadd.f32 %v1013, %v1322
        %v1324 = vpop.f32.mrb[0].mxu0
        %v1325 = vadd.f32 %v1009, %v1324
        %v1326 = vpop.f32.mrb[0].mxu0
        %v1327 = vadd.f32 %v1013, %v1326
        %1328 = vmatprep.mubr.bf16.mxu0 0
        %1329 = vmatmul.mubr.bf16.gmra.mrb[0].mxu0 %v976
        %v1330 = vpop.f32.mrb[0].mxu0
        %v1331 = vadd.f32 %v1009, %v1330
        %v1332 = vpop.f32.mrb[0].mxu0
        %v1333 = vadd.f32 %v1013, %v1332
        %v1334 = vpop.f32.mrb[0].mxu0
        %v1335 = vadd.f32 %v1009, %v1334
        %v1336 = vpop.f32.mrb[0].mxu0
        %v1337 = vadd.f32 %v1013, %v1336
        %1338 = vmatprep.mubr.bf16.mxu0 0
        %1339 = vmatmul.mubr.bf16.gmra.mrb[0].mxu0 %v977
        %v1340 = vpop.f32.mrb[0].mxu0
        %v1341 = vadd.f32 %v1009, %v1340
        %v1342 = vpop.f32.mrb[0].mxu0
        %v1343 = vadd.f32 %v1013, %v1342
        %v1344 = vpop.f32.mrb[0].mxu0
        %v1345 = vadd.f32 %v1009, %v1344
        %v1346 = vpop.f32.mrb[0].mxu0
        %v1347 = vadd.f32 %v1013, %v1346
        %1348 = vmatprep.mubr.bf16.mxu0 0
        %1349 = vmatmul.mubr.bf16.gmra.mrb[0].mxu0 %v978
        %v1350 = vpop.f32.mrb[0].mxu0
        %v1351 = vadd.f32 %v1009, %v1350
        %v1352 = vpop.f32.mrb[0].mxu0
        %v1353 = vadd.f32 %v1013, %v1352
        %v1354 = vpop.f32.mrb[0].mxu0
        %v1355 = vadd.f32 %v1009, %v1354
        %v1356 = vpop.f32.mrb[0].mxu0
        %v1357 = vadd.f32 %v1013, %v1356
        %1358 = vmatprep.mubr.bf16.mxu0 0
        %1359 = vmatmul.mubr.bf16.gmra.mrb[0].mxu0 %v979
        %v1360 = vpop.f32.mrb[0].mxu0
        %v1361 = vadd.f32 %v1009, %v1360
        %v1362 = vpop.f32.mrb[0].mxu0
        %v1363 = vadd.f32 %v1013, %v1362
        %v1364 = vpop.f32.mrb[0].mxu0
        %v1365 = vadd.f32 %v1009, %v1364
        %v1366 = vpop.f32.mrb[0].mxu0
        %v1367 = vadd.f32 %v1013, %v1366
        %1368 = vmatprep.mubr.bf16.mxu0 0
        %1369 = vmatmul.mubr.bf16.gmra.mrb[0].mxu0 %v980
        %v1370 = vpop.f32.mrb[0].mxu0
        %v1371 = vadd.f32 %v1009, %v1370
        %v1372 = vpop.f32.mrb[0].mxu0
        %v1373 = vadd.f32 %v1013, %v1372
        %v1374 = vpop.f32.mrb[0].mxu0
        %v1375 = vadd.f32 %v1009, %v1374
        %v1376 = vpop.f32.mrb[0].mxu0
        %v1377 = vadd.f32 %v1013, %v1376
        %1378 = vmatprep.mubr.bf16.mxu0 0
        %1379 = vmatmul.mubr.bf16.gmra.mrb[0].mxu0 %v981
        %v1380 = vpop.f32.mrb[0].mxu0
        %v1381 = vadd.f32 %v1009, %v1380
        %v1382 = vpop.f32.mrb[0].mxu0
        %v1383 = vadd.f32 %v1013, %v1382
        %v1384 = vpop.f32.mrb[0].mxu0
        %v1385 = vadd.f32 %v1009, %v1384
        %v1386 = vpop.f32.mrb[0].mxu0
        %v1387 = vadd.f32 %v1013, %v1386
        %1388 = vmatprep.mubr.bf16.mxu0 0
        %1389 = vmatmul.mubr.bf16.gmra.mrb[0].mxu0 %v982
        %v1390 = vpop.f32.mrb[0].mxu0
        %v1391 = vadd.f32 %v1009, %v1390
        %v1392 = vpop.f32.mrb[0].mxu0
        %v1393 = vadd.f32 %v1013, %v1392
        %v1394 = vpop.f32.mrb[0].mxu0
        %v1395 = vadd.f32 %v1009, %v1394
        %v1396 = vpop.f32.mrb[0].mxu0
        %v1397 = vadd.f32 %v1013, %v1396
        %1398 = vmatprep.mubr.bf16.mxu0 0
        %1399 = vmatmul.mubr.bf16.gmra.mrb[0].mxu0 %v983
        %v1400 = vpop.f32.mrb[0].mxu0
        %v1401 = vadd.f32 %v1009, %v1400
        %v1402 = vpop.f32.mrb[0].mxu0
        %v1403 = vadd.f32 %v1013, %v1402
        %v1404 = vpop.f32.mrb[0].mxu0
        %v1405 = vadd.f32 %v1009, %v1404
        %v1406 = vpop.f32.mrb[0].mxu0
        %v1407 = vadd.f32 %v1013, %v1406
        %1408 = vmatprep.mubr.bf16.mxu0 0
        %1409 = vmatmul.mubr.bf16.gmra.mrb[0].mxu0 %v984
        %v1410 = vpop.f32.mrb[0].mxu0
        %v1411 = vadd.f32 %v1009, %v1410
        %v1412 = vpop.f32.mrb[0].mxu0
        %v1413 = vadd.f32 %v1013, %v1412
        %v1414 = vpop.f32.mrb[0].mxu0
        %v1415 = vadd.f32 %v1009, %v1414
        %v1416 = vpop.f32.mrb[0].mxu0
        %v1417 = vadd.f32 %v1013, %v1416
        %1418 = vmatprep.mubr.bf16.mxu0 0
        %1419 = vmatmul.mubr.bf16.gmra.mrb[0].mxu0 %v985
        %v1420 = vpop.f32.mrb[0].mxu0
        %v1421 = vadd.f32 %v1009, %v1420
        %v1422 = vpop.f32.mrb[0].mxu0
        %v1423 = vadd.f32 %v1013, %v1422
        %v1424 = vpop.f32.mrb[0].mxu0
        %v1425 = vadd.f32 %v1009, %v1424
        %v1426 = vpop.f32.mrb[0].mxu0
        %v1427 = vadd.f32 %v1013, %v1426
        %1428 = vmatprep.mubr.bf16.mxu0 0
        %1429 = vmatmul.mubr.bf16.gmra.mrb[0].mxu0 %v986
        %v1430 = vpop.f32.mrb[0].mxu0
        %v1431 = vadd.f32 %v1009, %v1430
        %v1432 = vpop.f32.mrb[0].mxu0
        %v1433 = vadd.f32 %v1013, %v1432
        %v1434 = vpop.f32.mrb[0].mxu0
        %v1435 = vadd.f32 %v1009, %v1434
        %v1436 = vpop.f32.mrb[0].mxu0
        %v1437 = vadd.f32 %v1013, %v1436
        %1438 = vmatprep.mubr.bf16.mxu0 0
        %1439 = vmatmul.mubr.bf16.gmra.mrb[0].mxu0 %v987
        %v1440 = vpop.f32.mrb[0].mxu0
        %v1441 = vadd.f32 %v1009, %v1440
        %v1442 = vpop.f32.mrb[0].mxu0
        %v1443 = vadd.f32 %v1013, %v1442
        %v1444 = vpop.f32.mrb[0].mxu0
        %v1445 = vadd.f32 %v1009, %v1444
        %v1446 = vpop.f32.mrb[0].mxu0
        %v1447 = vadd.f32 %v1013, %v1446
        %1448 = vdwg.mxu0
        %1449 = vst [vmem:[%s272] sm:$0xff] %v1131
        %1450 = vst [vmem:[%s272 + $0x8] sm:$0xff] %v1133
        %1451 = vst [vmem:[%s272 + $0x10] sm:$0xff] %v1135
        %1452 = vst [vmem:[%s272 + $0x18] sm:$0xff] %v1137
        %1453 = vst [vmem:[%s272 + $0x20] sm:$0xff] %v1141
        %1454 = vst [vmem:[%s272 + $0x28] sm:$0xff] %v1143
        %1455 = vst [vmem:[%s272 + $0x30] sm:$0xff] %v1145
        %1456 = vst [vmem:[%s272 + $0x38] sm:$0xff] %v1147
        %1457 = vst [vmem:[%s272 + $0x40] sm:$0xff] %v1151
        %1458 = vst [vmem:[%s272 + $0x48] sm:$0xff] %v1153
        %1459 = vst [vmem:[%s272 + $0x50] sm:$0xff] %v1155
        %1460 = vst [vmem:[%s272 + $0x58] sm:$0xff] %v1157
        %1461 = vst [vmem:[%s272 + $0x60] sm:$0xff] %v1161
        %1462 = vst [vmem:[%s272 + $0x68] sm:$0xff] %v1163
        %1463 = vst [vmem:[%s272 + $0x70] sm:$0xff] %v1165
        %1464 = vst [vmem:[%s272 + $0x78] sm:$0xff] %v1167
        %1465 = vst [vmem:[%s272 + $0x80] sm:$0xff] %v1171
        %1466 = vst [vmem:[%s272 + $0x88] sm:$0xff] %v1173
        %1467 = vst [vmem:[%s272 + $0x90] sm:$0xff] %v1175
        %1468 = vst [vmem:[%s272 + $0x98] sm:$0xff] %v1177
        %1469 = vst [vmem:[%s272 + $0xa0] sm:$0xff] %v1181
        %1470 = vst [vmem:[%s272 + $0xa8] sm:$0xff] %v1183
        %1471 = vst [vmem:[%s272 + $0xb0] sm:$0xff] %v1185
        %1472 = vst [vmem:[%s272 + $0xb8] sm:$0xff] %v1187
        %1473 = vst [vmem:[%s272 + $0xc0] sm:$0xff] %v1191
        %1474 = vst [vmem:[%s272 + $0xc8] sm:$0xff] %v1193
        %1475 = vst [vmem:[%s272 + $0xd0] sm:$0xff] %v1195
        %1476 = vst [vmem:[%s272 + $0xd8] sm:$0xff] %v1197
        %1477 = vst [vmem:[%s272 + $0xe0] sm:$0xff] %v1201
        %1478 = vst [vmem:[%s272 + $0xe8] sm:$0xff] %v1203
        %1479 = vst [vmem:[%s272 + $0xf0] sm:$0xff] %v1205
        %1480 = vst [vmem:[%s272 + $0xf8] sm:$0xff] %v1207
        %1481 = vst [vmem:[%s272 + $0x100] sm:$0xff] %v1211
        %1482 = vst [vmem:[%s272 + $0x108] sm:$0xff] %v1213
        %1483 = vst [vmem:[%s272 + $0x110] sm:$0xff] %v1215
        %1484 = vst [vmem:[%s272 + $0x118] sm:$0xff] %v1217
        %1485 = vst [vmem:[%s272 + $0x120] sm:$0xff] %v1221
        %1486 = vst [vmem:[%s272 + $0x128] sm:$0xff] %v1223
        %1487 = vst [vmem:[%s272 + $0x130] sm:$0xff] %v1225
        %1488 = vst [vmem:[%s272 + $0x138] sm:$0xff] %v1227
        %1489 = vst [vmem:[%s272 + $0x140] sm:$0xff] %v1231
        %1490 = vst [vmem:[%s272 + $0x148] sm:$0xff] %v1233
        %1491 = vst [vmem:[%s272 + $0x150] sm:$0xff] %v1235
        %1492 = vst [vmem:[%s272 + $0x158] sm:$0xff] %v1237
        %1493 = vst [vmem:[%s272 + $0x160] sm:$0xff] %v1241
        %1494 = vst [vmem:[%s272 + $0x168] sm:$0xff] %v1243
        %1495 = vst [vmem:[%s272 + $0x170] sm:$0xff] %v1245
        %1496 = vst [vmem:[%s272 + $0x178] sm:$0xff] %v1247
        %1497 = vst [vmem:[%s272 + $0x180] sm:$0xff] %v1251
        %1498 = vst [vmem:[%s272 + $0x188] sm:$0xff] %v1253
        %1499 = vst [vmem:[%s272 + $0x190] sm:$0xff] %v1255
        %1500 = vst [vmem:[%s272 + $0x198] sm:$0xff] %v1257
        %1501 = vst [vmem:[%s272 + $0x1a0] sm:$0xff] %v1261
        %1502 = vst [vmem:[%s272 + $0x1a8] sm:$0xff] %v1263
        %1503 = vst [vmem:[%s272 + $0x1b0] sm:$0xff] %v1265
        %1504 = vst [vmem:[%s272 + $0x1b8] sm:$0xff] %v1267
        %1505 = vst [vmem:[%s272 + $0x1c0] sm:$0xff] %v1271
        %1506 = vst [vmem:[%s272 + $0x1c8] sm:$0xff] %v1273
        %1507 = vst [vmem:[%s272 + $0x1d0] sm:$0xff] %v1275
        %1508 = vst [vmem:[%s272 + $0x1d8] sm:$0xff] %v1277
        %1509 = vst [vmem:[%s272 + $0x1e0] sm:$0xff] %v1281
        %1510 = vst [vmem:[%s272 + $0x1e8] sm:$0xff] %v1283
        %1511 = vst [vmem:[%s272 + $0x1f0] sm:$0xff] %v1285
        %1512 = vst [vmem:[%s272 + $0x1f8] sm:$0xff] %v1287
        %1513 = vst [vmem:[%s272 + $0x200] sm:$0xff] %v1291
        %1514 = vst [vmem:[%s272 + $0x208] sm:$0xff] %v1293
        %1515 = vst [vmem:[%s272 + $0x210] sm:$0xff] %v1295
        %1516 = vst [vmem:[%s272 + $0x218] sm:$0xff] %v1297
        %1517 = vst [vmem:[%s272 + $0x220] sm:$0xff] %v1301
        %1518 = vst [vmem:[%s272 + $0x228] sm:$0xff] %v1303
        %1519 = vst [vmem:[%s272 + $0x230] sm:$0xff] %v1305
        %1520 = vst [vmem:[%s272 + $0x238] sm:$0xff] %v1307
        %1521 = vst [vmem:[%s272 + $0x240] sm:$0xff] %v1311
        %1522 = vst [vmem:[%s272 + $0x248] sm:$0xff] %v1313
        %1523 = vst [vmem:[%s272 + $0x250] sm:$0xff] %v1315
        %1524 = vst [vmem:[%s272 + $0x258] sm:$0xff] %v1317
        %1525 = vst [vmem:[%s272 + $0x260] sm:$0xff] %v1321
        %1526 = vst [vmem:[%s272 + $0x268] sm:$0xff] %v1323
        %1527 = vst [vmem:[%s272 + $0x270] sm:$0xff] %v1325
        %1528 = vst [vmem:[%s272 + $0x278] sm:$0xff] %v1327
        %1529 = vst [vmem:[%s272 + $0x280] sm:$0xff] %v1331
        %1530 = vst [vmem:[%s272 + $0x288] sm:$0xff] %v1333
        %1531 = vst [vmem:[%s272 + $0x290] sm:$0xff] %v1335
        %1532 = vst [vmem:[%s272 + $0x298] sm:$0xff] %v1337
        %1533 = vst [vmem:[%s272 + $0x2a0] sm:$0xff] %v1341
        %1534 = vst [vmem:[%s272 + $0x2a8] sm:$0xff] %v1343
        %1535 = vst [vmem:[%s272 + $0x2b0] sm:$0xff] %v1345
        %1536 = vst [vmem:[%s272 + $0x2b8] sm:$0xff] %v1347
        %1537 = vst [vmem:[%s272 + $0x2c0] sm:$0xff] %v1351
        %1538 = vst [vmem:[%s272 + $0x2c8] sm:$0xff] %v1353
        %1539 = vst [vmem:[%s272 + $0x2d0] sm:$0xff] %v1355
        %1540 = vst [vmem:[%s272 + $0x2d8] sm:$0xff] %v1357
        %1541 = vst [vmem:[%s272 + $0x2e0] sm:$0xff] %v1361
        %1542 = vst [vmem:[%s272 + $0x2e8] sm:$0xff] %v1363
        %1543 = vst [vmem:[%s272 + $0x2f0] sm:$0xff] %v1365
        %1544 = vst [vmem:[%s272 + $0x2f8] sm:$0xff] %v1367
        %1545 = vst [vmem:[%s272 + $0x300] sm:$0xff] %v1371
        %1546 = vst [vmem:[%s272 + $0x308] sm:$0xff] %v1373
        %1547 = vst [vmem:[%s272 + $0x310] sm:$0xff] %v1375
        %1548 = vst [vmem:[%s272 + $0x318] sm:$0xff] %v1377
        %1549 = vst [vmem:[%s272 + $0x320] sm:$0xff] %v1381
        %1550 = vst [vmem:[%s272 + $0x328] sm:$0xff] %v1383
        %1551 = vst [vmem:[%s272 + $0x330] sm:$0xff] %v1385
        %1552 = vst [vmem:[%s272 + $0x338] sm:$0xff] %v1387
        %1553 = vst [vmem:[%s272 + $0x340] sm:$0xff] %v1391
        %1554 = vst [vmem:[%s272 + $0x348] sm:$0xff] %v1393
        %1555 = vst [vmem:[%s272 + $0x350] sm:$0xff] %v1395
        %1556 = vst [vmem:[%s272 + $0x358] sm:$0xff] %v1397
        %1557 = vst [vmem:[%s272 + $0x360] sm:$0xff] %v1401
        %1558 = vst [vmem:[%s272 + $0x368] sm:$0xff] %v1403
        %1559 = vst [vmem:[%s272 + $0x370] sm:$0xff] %v1405
        %1560 = vst [vmem:[%s272 + $0x378] sm:$0xff] %v1407
        %1561 = vst [vmem:[%s272 + $0x380] sm:$0xff] %v1411
        %1562 = vst [vmem:[%s272 + $0x388] sm:$0xff] %v1413
        %1563 = vst [vmem:[%s272 + $0x390] sm:$0xff] %v1415
        %1564 = vst [vmem:[%s272 + $0x398] sm:$0xff] %v1417
        %1565 = vst [vmem:[%s272 + $0x3a0] sm:$0xff] %v1421
        %1566 = vst [vmem:[%s272 + $0x3a8] sm:$0xff] %v1423
        %1567 = vst [vmem:[%s272 + $0x3b0] sm:$0xff] %v1425
        %1568 = vst [vmem:[%s272 + $0x3b8] sm:$0xff] %v1427
        %1569 = vst [vmem:[%s272 + $0x3c0] sm:$0xff] %v1431
        %1570 = vst [vmem:[%s272 + $0x3c8] sm:$0xff] %v1433
        %1571 = vst [vmem:[%s272 + $0x3d0] sm:$0xff] %v1435
        %1572 = vst [vmem:[%s272 + $0x3d8] sm:$0xff] %v1437
        %1573 = vst [vmem:[%s272 + $0x3e0] sm:$0xff] %v1441
        %1574 = vst [vmem:[%s272 + $0x3e8] sm:$0xff] %v1443
        %1575 = vst [vmem:[%s272 + $0x3f0] sm:$0xff] %v1445
        %1576 = vst [vmem:[%s272 + $0x3f8] sm:$0xff] %v1447
        %s1577 = sand.u32 %s141, 1
        %s1578 = scalar_lea.sflag [#allocation4], %s1577
        %s1579 = sand.u32 %s141, 1
        %s1580 = smul.addr %s1579, 1024
        %s1581 = scalar_lea.vmem [#allocation8], %s1580
        // Predicated region
        $region53: #{autoencoder_forward.1} parent=39 // pred_check
          %p1582 = pneg %p151
        $region54: #{autoencoder_forward.1} parent=39 // pred_check_branch
          %1584 = sbr.rel (%p1582) target = $region56
        $region55: #{autoencoder_forward.1} parent=39 // pred_region
          %s1585 = smul.u32 64, %s23
          %s1587 = ssub.s32 16384, 16384
          %1588 = vsyncadd %s1578, %s1587
          %s1589 = smul.addr %s1585, 2
          %s1590 = smul.addr %s1589, 128
          %s1591 = scalar_lea.hbm %s5, %s1590
          %s1592 = sshll.u32 %s1581, 4
          %s1593 = int_to_ptr.vmem [resolvable:$true] %s1592
          %1598 = dma.vmem_to_hbm [thread:$0]  %s1593, 16384, %s1591, %s1578, 256, 256, 16
        $region56: #{autoencoder_forward.1} parent=39 // pred_fallthru
          _
      $region40: #{autoencoder_forward.1} parent=5 // pred_fallthru
        _
      %p1599 = scmp.le.s32.totalorder 2, %s18
      // Predicated region
      $region57: #{autoencoder_forward.1} parent=5 // pred_check
        %p1600 = pneg %p1599
      $region58: #{autoencoder_forward.1} parent=5 // pred_check_branch
        %1602 = sbr.rel (%p1600) target = $region60
      $region59: #{autoencoder_forward.1} parent=5 // pred_region
        %s1603 = ssub.s32 %s18, 2
        // Predicated region
        $region61: #{autoencoder_forward.1} parent=59 // pred_check
          %p1604 = pneg %p157
        $region62: #{autoencoder_forward.1} parent=59 // pred_check_branch
          %1606 = sbr.rel (%p1604) target = $region64
        $region63: #{autoencoder_forward.1} parent=59 // pred_region
          %s1607 = sand.u32 %s142, 1
          %s1608 = scalar_lea.sflag [#allocation4], %s1607
          %s1609 = sand.u32 %s142, 1
          %s1610 = smul.addr %s1609, 1024
          %s1611 = scalar_lea.vmem [#allocation8], %s1610
          %1612 = dma.done %s1608, 16384
        $region64: #{autoencoder_forward.1} parent=59 // pred_fallthru
          _
      $region60: #{autoencoder_forward.1} parent=5 // pred_fallthru
        _
    $region6: #{autoencoder_forward.1} parent=1 // loop_footer
      %s22 = sadd.s32 1, %s18
    $region7: #{autoencoder_forward.1} parent=1 // loop_footer_branch
      %17 = sbr.rel target = $region3
    $region8: #{autoencoder_forward.1} parent=1 // loop_exit
      _
    %1613 = vsyncpa [#allocation3], 1
    %s1614 = scalar_lea.sflag [#allocation3], 1
    %1615 = vsyncpa %s1614, 1
    %1616 = vsyncpa [#allocation6], 1
    %1617 = vsyncpa [#allocation4], 1
    %s1618 = scalar_lea.sflag [#allocation4], 1
    %1619 = vsyncpa %s1618, 1

</llo_original>
